<compile_context>
chip_gen: v7x
topology: tpu7x:2x2x1
jax: 0.10.0
libtpu: 0.0.40
codegen_flags: <defaults>
</compile_context>

<pallas_src>
import jax
import jax.numpy as jnp
from jax.experimental import pallas as pl
from jax.experimental.pallas import tpu as pltpu

_STATS_LANES = 128   # lane-dense stats row; lanes 0..3 = [loss_sum, c1, c2, c3]
_NUM_CORES = 2       # shard the batch across both v7x TCs; no-op on 1-TC chips


def _round_up(x, m):
    return (x + m - 1) // m * m


def _cdiv(a, b):
    return (a + b - 1) // b


def _sublane_multiple(dtype):
    # Min second-to-last tile dim per dtype packing: 8 (f32), 16 (bf16), 32 (i8).
    return max(8, 32 // jnp.dtype(dtype).itemsize)


def _vmem_budgets():
    # Generation-aware scoped-VMEM limit: 3/4 of per-core physical VMEM, capped
    # at 96 MiB (v5e/v6e: 128 MiB -> 96 MiB; v7x: 64 MiB -> 48 MiB).  Half of
    # it is the double-buffered-input budget; the rest is left for temporaries.
    try:
        cap = int(pltpu.get_tpu_info().vmem_capacity_bytes)
    except Exception:
        cap = 64 * 1024 * 1024          # conservative fallback (fits every gen)
    vmem_limit = min((cap * 3) // 4, 96 * 1024 * 1024)
    return vmem_limit, vmem_limit // 2


def _make_ce_kernel(n, c, tile_rows, blocks_per_core):
    def kernel(t_ref, p1_ref, p2_ref, p3_ref, stats_ref):
        step = pl.program_id(1)

        # Per-core resident (1, 8, 128) accumulator: zero on the core's 1st step.
        @pl.when(step == 0)
        def _():
            stats_ref[...] = jnp.zeros_like(stats_ref)

        # Row validity from the (unclamped) global block index: the trailing
        # partial block and any clamped duplicate step contribute nothing.
        gb = pl.program_id(0) * blocks_per_core + step
        row_ids = gb * tile_rows + jax.lax.broadcasted_iota(
            jnp.int32, (tile_rows, 1), 0)
        row_valid = row_ids < n                          # (TN, 1) bool
        valid_f = row_valid.astype(jnp.float32)

        t = t_ref[...]                                   # (TN, 1) int32
        p1 = p1_ref[...].astype(jnp.float32)             # head-1 CE math in f32
        class_ids = jax.lax.broadcasted_iota(jnp.int32, (tile_rows, c), 1)
        onehot = class_ids == t                          # (TN, C)

        # --- cross entropy on head 1: sum over valid rows of lse - target_logit
        m1 = jnp.max(p1, axis=-1, keepdims=True)
        lse = jnp.log(jnp.sum(jnp.exp(p1 - m1), axis=-1, keepdims=True)) + m1
        tgt_logit = jnp.sum(jnp.where(onehot, p1, 0.0), axis=-1, keepdims=True)
        # Garbage rows past N may carry NaN/Inf, but all reductions above are
        # per-row, so a cheap (TN, 1) select before the cross-row sum suffices.
        loss_sum = jnp.sum(jnp.where(row_valid, lse - tgt_logit, 0.0),
                           keepdims=True)                # (1, 1)

        # --- top-1 correct counts (first-max tie break == argmax semantics) ---
        def num_correct(p, mx=None):
            if mx is None:                               # heads 2/3 native dtype
                mx = jnp.max(p, axis=-1, keepdims=True)
            first_max = jnp.min(jnp.where(p == mx, class_ids, c),
                                axis=-1, keepdims=True)
            hit = (first_max == t).astype(jnp.float32) * valid_f
            return jnp.sum(hit, keepdims=True)           # (1, 1)

        c1 = num_correct(p1, m1)          # reuse the LSE row max for head 1
        c2 = num_correct(p2_ref[...])
        c3 = num_correct(p3_ref[...])

        # Accumulate the four partials into lanes 0..3 of this core's block.
        lane = jax.lax.broadcasted_iota(jnp.int32, (1, 8, _STATS_LANES), 2)
        zeros = jnp.zeros((1, 8, _STATS_LANES), jnp.float32)
        stats_ref[...] += (jnp.where(lane == 0, loss_sum, zeros)
                           + jnp.where(lane == 1, c1, zeros)
                           + jnp.where(lane == 2, c2, zeros)
                           + jnp.where(lane == 3, c3, zeros))

    return kernel


def _standard_ce_pallas(pred_1, pred_2, pred_3, targets, *, tile_rows=None):
    n, c = pred_1.shape
    vmem_limit, input_budget = _vmem_budgets()

    sub = max(_sublane_multiple(p.dtype) for p in (pred_1, pred_2, pred_3))
    # 3 prediction streams (+ tiny targets), double-buffered by the pipeline.
    bytes_per_row = 2 * (c * sum(jnp.dtype(p.dtype).itemsize
                                 for p in (pred_1, pred_2, pred_3)) + 4)
    if tile_rows is None:
        tile_rows = min(1024, input_budget // bytes_per_row)
    tile_rows = max(sub, min(int(tile_rows), _round_up(n, sub)))
    tile_rows = _round_up(tile_rows, sub)

    num_blocks = _cdiv(n, tile_rows)
    blocks_per_core = _cdiv(num_blocks, _NUM_CORES)

    t2d = targets.astype(jnp.int32).reshape(n, 1)

    def blk(co, i):
        # Clamp so the (rare) extra step when num_blocks is odd re-reads the
        # last real block; its rows are fully masked in-kernel via `gb`.
        return (jnp.minimum(co * blocks_per_core + i, num_blocks - 1), 0)

    pred_spec = pl.BlockSpec((tile_rows, c), blk)
    tgt_spec = pl.BlockSpec((tile_rows, 1), blk)

    stats = pl.pallas_call(
        _make_ce_kernel(n, c, tile_rows, blocks_per_core),
        out_shape=jax.ShapeDtypeStruct((_NUM_CORES, 8, _STATS_LANES),
                                       jnp.float32),
        grid=(_NUM_CORES, blocks_per_core),
        in_specs=[tgt_spec, pred_spec, pred_spec, pred_spec],
        out_specs=pl.BlockSpec((1, 8, _STATS_LANES), lambda co, i: (co, 0, 0)),
        compiler_params=pltpu.CompilerParams(
            # batch-within-core axis carries the resident accumulator.
            dimension_semantics=("parallel", "arbitrary"),
            vmem_limit_bytes=int(vmem_limit),
        ),
    )(t2d, pred_1, pred_2, pred_3)

    totals = jnp.sum(stats[:, 0, :4], axis=0)       # combine per-core partials
    inv_n = 1.0 / n
    return (totals[0] * inv_n, totals[1] * inv_n,
            totals[2] * inv_n, totals[3] * inv_n)


def _standard_ce_jax(pred_1, pred_2, pred_3, targets):
    # Pure-JAX path (also used as the correctness reference).
    logp = jax.nn.log_softmax(pred_1.astype(jnp.float32), axis=-1)
    tgt = targets.astype(jnp.int32)
    loss = -jnp.mean(jnp.take_along_axis(logp, tgt[:, None], axis=-1))
    acc = lambda p: jnp.mean((jnp.argmax(p, axis=-1) == tgt).astype(jnp.float32))
    return loss, acc(pred_1), acc(pred_2), acc(pred_3)


def standard_ce(inputs, targets, *, tile_rows=None):
    """Pallas port of StandardCE.forward.

    TODO(synk): F.cross_entropy's default ignore_index=-100 is not handled;
    targets are assumed to lie in [0, C).
    """
    pred_1, pred_2, pred_3 = inputs['pred_1'], inputs['pred_2'], inputs['pred_3']
    assert pred_2.shape == pred_1.shape and pred_3.shape == pred_1.shape, \
        "all heads must share the same (N, C) shape"
    n, c = pred_1.shape

    if n * c < 16384:
        # Tiny problem: pallas_call fixed overhead dwarfs the actual work.
        loss, a1, a2, a3 = _standard_ce_jax(pred_1, pred_2, pred_3, targets)
    else:
        loss, a1, a2, a3 = _standard_ce_pallas(
            pred_1, pred_2, pred_3, targets, tile_rows=tile_rows)

    return {
        'loss_discrimination': loss,
        'loss_interpretation': 0,
        'loss_total': loss,
        'n_positive_sample': n,
        'ACC1': a1,
        'ACC2': a2,
        'ACC3': a3,
    }


if __name__ == "__main__":
    key = jax.random.PRNGKey(0)
    k1, k2, k3, kt = jax.random.split(key, 4)
    # Non-multiples of (8, 128) so the partial-block masking path is exercised.
    N, C = 200, 200

    inputs = {
        'pred_1': jax.random.normal(k1, (N, C), dtype=jnp.float32),
        'pred_2': jax.random.normal(k2, (N, C), dtype=jnp.float32),
        'pred_3': jax.random.normal(k3, (N, C), dtype=jnp.float32),
    }
    targets = jax.random.randint(kt, (N,), 0, C, dtype=jnp.int32)

    # tile_rows=64 -> 4 blocks split over the 2-core grid: exercises tiling,
    # the partial trailing block, cross-step accumulation and core combine.
    out = standard_ce(inputs, targets, tile_rows=64)
    jax.block_until_ready(out)

    # Sanity check against the pure-JAX reference.
    ref_loss, ref_a1, ref_a2, ref_a3 = _standard_ce_jax(
        inputs['pred_1'], inputs['pred_2'], inputs['pred_3'], targets)
    assert jnp.allclose(out['loss_total'], ref_loss, atol=1e-5), "loss mismatch"
    assert jnp.allclose(out['ACC1'], ref_a1, atol=1e-6), "ACC1 mismatch"
    assert jnp.allclose(out['ACC2'], ref_a2, atol=1e-6), "ACC2 mismatch"
    assert jnp.allclose(out['ACC3'], ref_a3, atol=1e-6), "ACC3 mismatch"

    print("KERNEL_OK")
</pallas_src>

<mosaic_0001>
module attributes {stable_mosaic.version = 11 : i64} {
  func.func @kernel(%arg0: i32, %arg1: i32, %arg2: memref<64x1xi32, #tpu.memory_space<vmem>>, %arg3: memref<64x200xf32, #tpu.memory_space<vmem>>, %arg4: memref<64x200xf32, #tpu.memory_space<vmem>>, %arg5: memref<64x200xf32, #tpu.memory_space<vmem>>, %arg6: memref<1x8x128xf32, #tpu.memory_space<vmem>>) attributes {dimension_semantics = [#tpu.dimension_semantics<parallel>, #tpu.dimension_semantics<arbitrary>], iteration_bounds = array<i64: 2, 2>, scalar_prefetch = 0 : i64, scratch_operands = 0 : i64, tpu.core_type = #tpu.core_type<tc>, window_params = [{transform_indices = @transform_0, window_bounds = array<i64: 64, 1>}, {transform_indices = @transform_1, window_bounds = array<i64: 64, 200>}, {transform_indices = @transform_2, window_bounds = array<i64: 64, 200>}, {transform_indices = @transform_3, window_bounds = array<i64: 64, 200>}, {transform_indices = @transform_4, window_bounds = array<i64: 1, 8, 128>}]} {
    %c0_i32 = arith.constant 0 : i32
    %0 = arith.cmpi eq, %arg1, %c0_i32 : i32
    %1 = arith.extui %0 : i1 to i32
    %c0_i32_0 = arith.constant 0 : i32
    %2 = arith.cmpi ne, %1, %c0_i32_0 : i32
    scf.if %2 {
      %cst_33 = arith.constant 0.000000e+00 : f32
      %118 = vector.broadcast %cst_33 : f32 to vector<1x8x128xf32>
      %c0_34 = arith.constant 0 : index
      %c0_35 = arith.constant 0 : index
      %c0_36 = arith.constant 0 : index
      %119 = vector.load %arg6[%c0_34, %c0_35, %c0_36] : memref<1x8x128xf32, #tpu.memory_space<vmem>>, vector<1x8x128xf32>
      tpu.vector_store %arg6[%c0_34, %c0_35, %c0_36], %118 {strides = array<i32>} : memref<1x8x128xf32, #tpu.memory_space<vmem>>, vector<1x8x128xf32>,
    } else {
    }
    %c2_i32 = arith.constant 2 : i32
    %3 = arith.muli %arg0, %c2_i32 : i32
    %4 = arith.addi %3, %arg1 : i32
    %c64_i32 = arith.constant 64 : i32
    %5 = arith.muli %4, %c64_i32 : i32
    %6 = tpu.iota {dimensions = array<i32: 0>} : vector<64x1xi32>
    %7 = vector.broadcast %5 : i32 to vector<64x1xi32>
    %8 = arith.addi %7, %6 : vector<64x1xi32>
    %c200_i32 = arith.constant 200 : i32
    %9 = vector.broadcast %c200_i32 : i32 to vector<64x1xi32>
    %10 = arith.cmpi slt, %8, %9 : vector<64x1xi32>
    %11 = arith.extui %10 : vector<64x1xi1> to vector<64x1xi32>
    %12 = arith.sitofp %11 : vector<64x1xi32> to vector<64x1xf32>
    %c0 = arith.constant 0 : index
    %c0_1 = arith.constant 0 : index
    %13 = vector.load %arg2[%c0, %c0_1] : memref<64x1xi32, #tpu.memory_space<vmem>>, vector<64x1xi32>
    %c0_2 = arith.constant 0 : index
    %c0_3 = arith.constant 0 : index
    %14 = vector.load %arg3[%c0_2, %c0_3] : memref<64x200xf32, #tpu.memory_space<vmem>>, vector<64x200xf32>
    %15 = tpu.iota {dimensions = array<i32: 1>} : vector<64x200xi32>
    %16 = vector.broadcast %13 : vector<64x1xi32> to vector<64x200xi32>
    %17 = arith.cmpi eq, %15, %16 : vector<64x200xi32>
    %cst = arith.constant dense<0xFF800000> : vector<64xf32>
    %18 = vector.multi_reduction <maximumf>, %14, %cst [1] : vector<64x200xf32> to vector<64xf32>
    %19 = vector.shape_cast %18 : vector<64xf32> to vector<64x1xf32>
    %20 = vector.broadcast %19 : vector<64x1xf32> to vector<64x200xf32>
    %21 = arith.subf %14, %20 : vector<64x200xf32>
    %22 = math.exp %21 : vector<64x200xf32>
    %cst_4 = arith.constant dense<0.000000e+00> : vector<64xf32>
    %23 = vector.multi_reduction <add>, %22, %cst_4 [1] : vector<64x200xf32> to vector<64xf32>
    %24 = vector.shape_cast %23 : vector<64xf32> to vector<64x1xf32>
    %25 = math.log %24 : vector<64x1xf32>
    %26 = arith.addf %25, %19 : vector<64x1xf32>
    %cst_5 = arith.constant 0.000000e+00 : f32
    %27 = vector.broadcast %cst_5 : f32 to vector<64x200xf32>
    %28 = arith.select %17, %14, %27 : vector<64x200xi1>, vector<64x200xf32>
    %cst_6 = arith.constant dense<0.000000e+00> : vector<64xf32>
    %29 = vector.multi_reduction <add>, %28, %cst_6 [1] : vector<64x200xf32> to vector<64xf32>
    %30 = vector.shape_cast %29 : vector<64xf32> to vector<64x1xf32>
    %31 = arith.subf %26, %30 : vector<64x1xf32>
    %cst_7 = arith.constant 0.000000e+00 : f32
    %32 = vector.broadcast %cst_7 : f32 to vector<64x1xf32>
    %33 = arith.select %10, %31, %32 : vector<64x1xi1>, vector<64x1xf32>
    %34 = vector.shape_cast %33 : vector<64x1xf32> to vector<1x64x1xf32>
    %cst_8 = arith.constant dense<0.000000e+00> : vector<1xf32>
    %35 = vector.multi_reduction <add>, %34, %cst_8 [1, 2] : vector<1x64x1xf32> to vector<1xf32>
    %36 = vector.shape_cast %35 : vector<1xf32> to vector<1x1x1xf32>
    %37 = vector.extract %36[0, 0, 0] : f32 from vector<1x1x1xf32>
    %38 = vector.broadcast %37 : f32 to vector<1x1xf32>
    %39 = vector.broadcast %19 : vector<64x1xf32> to vector<64x200xf32>
    %40 = arith.cmpf oeq, %14, %39 : vector<64x200xf32>
    %c200_i32_9 = arith.constant 200 : i32
    %41 = vector.broadcast %c200_i32_9 : i32 to vector<64x200xi32>
    %42 = arith.select %40, %15, %41 : vector<64x200xi1>, vector<64x200xi32>
    %cst_10 = arith.constant dense<2147483647> : vector<64xi32>
    %43 = vector.multi_reduction <minsi>, %42, %cst_10 [1] : vector<64x200xi32> to vector<64xi32>
    %44 = vector.shape_cast %43 : vector<64xi32> to vector<64x1xi32>
    %45 = arith.cmpi eq, %44, %13 : vector<64x1xi32>
    %46 = arith.extui %45 : vector<64x1xi1> to vector<64x1xi32>
    %47 = arith.sitofp %46 : vector<64x1xi32> to vector<64x1xf32>
    %48 = arith.mulf %47, %12 : vector<64x1xf32>
    %49 = vector.shape_cast %48 : vector<64x1xf32> to vector<1x64x1xf32>
    %cst_11 = arith.constant dense<0.000000e+00> : vector<1xf32>
    %50 = vector.multi_reduction <add>, %49, %cst_11 [1, 2] : vector<1x64x1xf32> to vector<1xf32>
    %51 = vector.shape_cast %50 : vector<1xf32> to vector<1x1x1xf32>
    %52 = vector.extract %51[0, 0, 0] : f32 from vector<1x1x1xf32>
    %53 = vector.broadcast %52 : f32 to vector<1x1xf32>
    %c0_12 = arith.constant 0 : index
    %c0_13 = arith.constant 0 : index
    %54 = vector.load %arg4[%c0_12, %c0_13] : memref<64x200xf32, #tpu.memory_space<vmem>>, vector<64x200xf32>
    %cst_14 = arith.constant dense<0xFF800000> : vector<64xf32>
    %55 = vector.multi_reduction <maximumf>, %54, %cst_14 [1] : vector<64x200xf32> to vector<64xf32>
    %56 = vector.shape_cast %55 : vector<64xf32> to vector<64x1xf32>
    %57 = vector.broadcast %56 : vector<64x1xf32> to vector<64x200xf32>
    %58 = arith.cmpf oeq, %54, %57 : vector<64x200xf32>
    %c200_i32_15 = arith.constant 200 : i32
    %59 = vector.broadcast %c200_i32_15 : i32 to vector<64x200xi32>
    %60 = arith.select %58, %15, %59 : vector<64x200xi1>, vector<64x200xi32>
    %cst_16 = arith.constant dense<2147483647> : vector<64xi32>
    %61 = vector.multi_reduction <minsi>, %60, %cst_16 [1] : vector<64x200xi32> to vector<64xi32>
    %62 = vector.shape_cast %61 : vector<64xi32> to vector<64x1xi32>
    %63 = arith.cmpi eq, %62, %13 : vector<64x1xi32>
    %64 = arith.extui %63 : vector<64x1xi1> to vector<64x1xi32>
    %65 = arith.sitofp %64 : vector<64x1xi32> to vector<64x1xf32>
    %66 = arith.mulf %65, %12 : vector<64x1xf32>
    %67 = vector.shape_cast %66 : vector<64x1xf32> to vector<1x64x1xf32>
    %cst_17 = arith.constant dense<0.000000e+00> : vector<1xf32>
    %68 = vector.multi_reduction <add>, %67, %cst_17 [1, 2] : vector<1x64x1xf32> to vector<1xf32>
    %69 = vector.shape_cast %68 : vector<1xf32> to vector<1x1x1xf32>
    %70 = vector.extract %69[0, 0, 0] : f32 from vector<1x1x1xf32>
    %71 = vector.broadcast %70 : f32 to vector<1x1xf32>
    %c0_18 = arith.constant 0 : index
    %c0_19 = arith.constant 0 : index
    %72 = vector.load %arg5[%c0_18, %c0_19] : memref<64x200xf32, #tpu.memory_space<vmem>>, vector<64x200xf32>
    %cst_20 = arith.constant dense<0xFF800000> : vector<64xf32>
    %73 = vector.multi_reduction <maximumf>, %72, %cst_20 [1] : vector<64x200xf32> to vector<64xf32>
    %74 = vector.shape_cast %73 : vector<64xf32> to vector<64x1xf32>
    %75 = vector.broadcast %74 : vector<64x1xf32> to vector<64x200xf32>
    %76 = arith.cmpf oeq, %72, %75 : vector<64x200xf32>
    %c200_i32_21 = arith.constant 200 : i32
    %77 = vector.broadcast %c200_i32_21 : i32 to vector<64x200xi32>
    %78 = arith.select %76, %15, %77 : vector<64x200xi1>, vector<64x200xi32>
    %cst_22 = arith.constant dense<2147483647> : vector<64xi32>
    %79 = vector.multi_reduction <minsi>, %78, %cst_22 [1] : vector<64x200xi32> to vector<64xi32>
    %80 = vector.shape_cast %79 : vector<64xi32> to vector<64x1xi32>
    %81 = arith.cmpi eq, %80, %13 : vector<64x1xi32>
    %82 = arith.extui %81 : vector<64x1xi1> to vector<64x1xi32>
    %83 = arith.sitofp %82 : vector<64x1xi32> to vector<64x1xf32>
    %84 = arith.mulf %83, %12 : vector<64x1xf32>
    %85 = vector.shape_cast %84 : vector<64x1xf32> to vector<1x64x1xf32>
    %cst_23 = arith.constant dense<0.000000e+00> : vector<1xf32>
    %86 = vector.multi_reduction <add>, %85, %cst_23 [1, 2] : vector<1x64x1xf32> to vector<1xf32>
    %87 = vector.shape_cast %86 : vector<1xf32> to vector<1x1x1xf32>
    %88 = vector.extract %87[0, 0, 0] : f32 from vector<1x1x1xf32>
    %89 = vector.broadcast %88 : f32 to vector<1x1xf32>
    %90 = tpu.iota {dimensions = array<i32: 2>} : vector<1x8x128xi32>
    %cst_24 = arith.constant 0.000000e+00 : f32
    %91 = vector.broadcast %cst_24 : f32 to vector<1x8x128xf32>
    %c0_25 = arith.constant 0 : index
    %c0_26 = arith.constant 0 : index
    %c0_27 = arith.constant 0 : index
    %92 = vector.load %arg6[%c0_25, %c0_26, %c0_27] : memref<1x8x128xf32, #tpu.memory_space<vmem>>, vector<1x8x128xf32>
    %c0_i32_28 = arith.constant 0 : i32
    %93 = vector.broadcast %c0_i32_28 : i32 to vector<1x8x128xi32>
    %94 = arith.cmpi eq, %90, %93 : vector<1x8x128xi32>
    %95 = vector.shape_cast %38 : vector<1x1xf32> to vector<1x1x1xf32>
    %96 = vector.broadcast %95 : vector<1x1x1xf32> to vector<1x8x128xf32>
    %97 = arith.select %94, %96, %91 : vector<1x8x128xi1>, vector<1x8x128xf32>
    %c1_i32 = arith.constant 1 : i32
    %98 = vector.broadcast %c1_i32 : i32 to vector<1x8x128xi32>
    %99 = arith.cmpi eq, %90, %98 : vector<1x8x128xi32>
    %100 = vector.shape_cast %53 : vector<1x1xf32> to vector<1x1x1xf32>
    %101 = vector.broadcast %100 : vector<1x1x1xf32> to vector<1x8x128xf32>
    %102 = arith.select %99, %101, %91 : vector<1x8x128xi1>, vector<1x8x128xf32>
    %103 = arith.addf %97, %102 : vector<1x8x128xf32>
    %c2_i32_29 = arith.constant 2 : i32
    %104 = vector.broadcast %c2_i32_29 : i32 to vector<1x8x128xi32>
    %105 = arith.cmpi eq, %90, %104 : vector<1x8x128xi32>
    %106 = vector.shape_cast %71 : vector<1x1xf32> to vector<1x1x1xf32>
    %107 = vector.broadcast %106 : vector<1x1x1xf32> to vector<1x8x128xf32>
    %108 = arith.select %105, %107, %91 : vector<1x8x128xi1>, vector<1x8x128xf32>
    %109 = arith.addf %103, %108 : vector<1x8x128xf32>
    %c3_i32 = arith.constant 3 : i32
    %110 = vector.broadcast %c3_i32 : i32 to vector<1x8x128xi32>
    %111 = arith.cmpi eq, %90, %110 : vector<1x8x128xi32>
    %112 = vector.shape_cast %89 : vector<1x1xf32> to vector<1x1x1xf32>
    %113 = vector.broadcast %112 : vector<1x1x1xf32> to vector<1x8x128xf32>
    %114 = arith.select %111, %113, %91 : vector<1x8x128xi1>, vector<1x8x128xf32>
    %115 = arith.addf %109, %114 : vector<1x8x128xf32>
    %116 = arith.addf %92, %115 : vector<1x8x128xf32>
    %c0_30 = arith.constant 0 : index
    %c0_31 = arith.constant 0 : index
    %c0_32 = arith.constant 0 : index
    %117 = vector.load %arg6[%c0_30, %c0_31, %c0_32] : memref<1x8x128xf32, #tpu.memory_space<vmem>>, vector<1x8x128xf32>
    tpu.vector_store %arg6[%c0_30, %c0_31, %c0_32], %116 {strides = array<i32>} : memref<1x8x128xf32, #tpu.memory_space<vmem>>, vector<1x8x128xf32>,
    return
  }
  func.func @transform_0(%arg0: i32, %arg1: i32) -> (i32, i32) {
    %c2_i32 = arith.constant 2 : i32
    %0 = arith.muli %arg0, %c2_i32 : i32
    %1 = arith.addi %0, %arg1 : i32
    %c3_i32 = arith.constant 3 : i32
    %2 = arith.minsi %1, %c3_i32 : i32
    %c0_i32 = arith.constant 0 : i32
    %c0_i32_0 = arith.constant 0 : i32
    return %2, %c0_i32 : i32, i32
  }
  func.func @transform_1(%arg0: i32, %arg1: i32) -> (i32, i32) {
    %c2_i32 = arith.constant 2 : i32
    %0 = arith.muli %arg0, %c2_i32 : i32
    %1 = arith.addi %0, %arg1 : i32
    %c3_i32 = arith.constant 3 : i32
    %2 = arith.minsi %1, %c3_i32 : i32
    %c0_i32 = arith.constant 0 : i32
    %c0_i32_0 = arith.constant 0 : i32
    return %2, %c0_i32 : i32, i32
  }
  func.func @transform_2(%arg0: i32, %arg1: i32) -> (i32, i32) {
    %c2_i32 = arith.constant 2 : i32
    %0 = arith.muli %arg0, %c2_i32 : i32
    %1 = arith.addi %0, %arg1 : i32
    %c3_i32 = arith.constant 3 : i32
    %2 = arith.minsi %1, %c3_i32 : i32
    %c0_i32 = arith.constant 0 : i32
    %c0_i32_0 = arith.constant 0 : i32
    return %2, %c0_i32 : i32, i32
  }
  func.func @transform_3(%arg0: i32, %arg1: i32) -> (i32, i32) {
    %c2_i32 = arith.constant 2 : i32
    %0 = arith.muli %arg0, %c2_i32 : i32
    %1 = arith.addi %0, %arg1 : i32
    %c3_i32 = arith.constant 3 : i32
    %2 = arith.minsi %1, %c3_i32 : i32
    %c0_i32 = arith.constant 0 : i32
    %c0_i32_0 = arith.constant 0 : i32
    return %2, %c0_i32 : i32, i32
  }
  func.func @transform_4(%arg0: i32, %arg1: i32) -> (i32, i32, i32) {
    %c0_i32 = arith.constant 0 : i32
    %c0_i32_0 = arith.constant 0 : i32
    %c0_i32_1 = arith.constant 0 : i32
    return %arg0, %c0_i32, %c0_i32_0 : i32, i32, i32
  }
}

</mosaic_0001>

<llo_original>
// kernel: tpu_custom_call.1
$region0: #{tpu_custom_call.1}
  #allocation0 [shape = 'u32[]', space=smem, size = 0x4, offset = 0x4, fixed_abs, tag = 'smem constant byte address 0x4 - core index']
  #allocation1 [shape = 'u32[144,128]{1,0:T(1,128)}', space=vmem, size = 0x12000, scoped, tag = 'internal scratch']
  %s0 = inlined_call_operand.vmem [shape: s32[200,1], index: 0, kind: input, shape index: {}]
  %s1 = inlined_call_operand.hbm [shape: f32[200,200], index: 1, kind: input, shape index: {}]
  %s2 = inlined_call_operand.hbm [shape: f32[200,200], index: 2, kind: input, shape index: {}]
  %s3 = inlined_call_operand.hbm [shape: f32[200,200], index: 3, kind: input, shape index: {}]
  %s4 = inlined_call_operand.hbm [shape: f32[2,8,128], index: 4, kind: output, shape index: {}]
  %s5 = sld [smem:[#allocation0]]
  $region65: #{tpu_custom_call.1} parent=0
    _
  %s7 = ssub.s32 1, %s5
  %s8 = scalar_select 0, %s7, %s5
  $region1: #{tpu_custom_call.1} parent=0
    #allocation2 [shape = 'u8[131072]{0}', space=vmem, size = 0x20000, scoped, tag = 'input window, operand 1']
    #allocation3 [shape = 's32[2]{0}', space=sflag, size = 0x8, scoped, tag = 'scoped memory for tpu_custom_call.1']
    #allocation4 [shape = 's32[2]{0}', space=sflag, size = 0x8, scoped, tag = 'scoped memory for tpu_custom_call.1']
    #allocation5 [shape = 'u8[131072]{0}', space=vmem, size = 0x20000, scoped, tag = 'input window, operand 2']
    #allocation6 [shape = 's32[2]{0}', space=sflag, size = 0x8, scoped, tag = 'scoped memory for tpu_custom_call.1']
    #allocation7 [shape = 'u8[131072]{0}', space=vmem, size = 0x20000, scoped, tag = 'input window, operand 3']
    #allocation8 [shape = 'u8[8192]{0}', space=vmem, size = 0x2000, scoped, tag = 'output window, operand 0']
    %9 = vsyncpa [#allocation3], 0
    %s10 = scalar_lea.sflag [#allocation3], 1
    %11 = vsyncpa %s10, 0
    %12 = vsyncpa [#allocation6], 0
    %s13 = scalar_lea.sflag [#allocation6], 1
    %14 = vsyncpa %s13, 0
    %15 = vsyncpa [#allocation4], 0
    %s16 = scalar_lea.sflag [#allocation4], 1
    %17 = vsyncpa %s16, 0
    loop: start=0, step=1, limit=6
    $region2: #{tpu_custom_call.1} parent=1 // loop_pre_header
      _
    $region3: #{tpu_custom_call.1} parent=1 // loop_header
      %s19 = sphi 0, %s23
      %p20 = scmp.ge.s32.totalorder %s19, 6
      %s26 = sphi 0, %s38
      %s27 = sphi 0, %s34
      %s28 = sphi 0, %s26
      %s29 = sphi 0, %s27
      %s30 = sphi 0, %s28
      %s31 = sphi 0, %s29
      %s49 = sphi 0, %s51
      %s52 = sphi 0, %s49
      %s53 = sphi 0, %s52
      %s69 = sphi 0, %s53
      %s83 = sphi 0, %s85
      %s86 = sphi 0, %s83
      %s87 = sphi 0, %s86
      %s103 = sphi 0, %s87
      %s117 = sphi 0, %s119
      %s120 = sphi 0, %s117
      %s121 = sphi 0, %s120
      %s137 = sphi 0, %s121
      %s151 = sphi 0, %s153
      %s154 = sphi 0, %s151
      %s155 = sphi 0, %s154
      %s171 = sphi 0, %s155
      %s177 = sphi 0, %s179
      %s180 = sphi 0, %s177
      %s181 = sphi 0, %s180
      %s197 = sphi 0, %s181
    $region4: #{tpu_custom_call.1} parent=1 // loop_header_branch
      %22 = sbr.rel (%p20) target = $region8
    $region5: #{tpu_custom_call.1} parent=1 // loop_body
      %s24 = ssub.s32 %s19, 1
      %s25 = ssub.s32 %s19, 2
      %s32 = sadd.s32 1, %s27
      %p33 = scmp.ge.s32.totalorder %s32, 2
      %s34 = scalar_select %p33, 0, %s32
      %s35 = sadd.s32 1, %s26
      %s36 = scalar_select %p33, %s35, %s26
      %p37 = scmp.ge.s32.totalorder %s36, 2
      %s38 = scalar_select %p37, 0, %s36
      %s39 = smul.u32 %s26, 2
      %s40 = sadd.s32 %s39, %s27
      %p41 = scmp.lt.s32.totalorder %s40, 3
      %s42 = scalar_select %p41, %s40, 3
      %s43 = smul.u32 %s38, 2
      %s44 = sadd.s32 %s43, %s34
      %p45 = scmp.lt.s32.totalorder %s44, 3
      %s46 = scalar_select %p45, %s44, 3
      %s47 = ssub.s32 %s42, %s46
      %p48 = scmp.eq.s32.totalorder %s47, 0
      %s50 = sadd.s32 %s49, 1
      %s51 = scalar_select %p48, %s49, %s50
      %p54 = pneg %p48
      %p55 = scmp.eq.s32.totalorder %s19, 3
      %p56 = por %p54, %p55
      %p57 = scmp.ne.s32.totalorder %s49, %s52
      %p58 = scmp.eq.s32.totalorder %s19, 0
      %p59 = por %p57, %p58
      %p60 = scmp.ne.s32.totalorder %s49, %s52
      %p61 = scmp.eq.s32.totalorder %s24, 3
      %p62 = por %p60, %p61
      %p63 = scmp.ne.s32.totalorder %s52, %s53
      %p64 = scmp.eq.s32.totalorder %s24, 0
      %p65 = por %p63, %p64
      %p66 = scmp.ne.s32.totalorder %s52, %s53
      %p67 = scmp.eq.s32.totalorder %s25, 3
      %p68 = por %p66, %p67
      %p70 = scmp.ne.s32.totalorder %s53, %s69
      %p71 = scmp.eq.s32.totalorder %s25, 0
      %p72 = por %p70, %p71
      %s73 = smul.u32 %s26, 2
      %s74 = sadd.s32 %s73, %s27
      %p75 = scmp.lt.s32.totalorder %s74, 3
      %s76 = scalar_select %p75, %s74, 3
      %s77 = smul.u32 %s38, 2
      %s78 = sadd.s32 %s77, %s34
      %p79 = scmp.lt.s32.totalorder %s78, 3
      %s80 = scalar_select %p79, %s78, 3
      %s81 = ssub.s32 %s76, %s80
      %p82 = scmp.eq.s32.totalorder %s81, 0
      %s84 = sadd.s32 %s83, 1
      %s85 = scalar_select %p82, %s83, %s84
      %p88 = pneg %p82
      %p89 = scmp.eq.s32.totalorder %s19, 3
      %p90 = por %p88, %p89
      %p91 = scmp.ne.s32.totalorder %s83, %s86
      %p92 = scmp.eq.s32.totalorder %s19, 0
      %p93 = por %p91, %p92
      %p94 = scmp.ne.s32.totalorder %s83, %s86
      %p95 = scmp.eq.s32.totalorder %s24, 3
      %p96 = por %p94, %p95
      %p97 = scmp.ne.s32.totalorder %s86, %s87
      %p98 = scmp.eq.s32.totalorder %s24, 0
      %p99 = por %p97, %p98
      %p100 = scmp.ne.s32.totalorder %s86, %s87
      %p101 = scmp.eq.s32.totalorder %s25, 3
      %p102 = por %p100, %p101
      %p104 = scmp.ne.s32.totalorder %s87, %s103
      %p105 = scmp.eq.s32.totalorder %s25, 0
      %p106 = por %p104, %p105
      %s107 = smul.u32 %s26, 2
      %s108 = sadd.s32 %s107, %s27
      %p109 = scmp.lt.s32.totalorder %s108, 3
      %s110 = scalar_select %p109, %s108, 3
      %s111 = smul.u32 %s38, 2
      %s112 = sadd.s32 %s111, %s34
      %p113 = scmp.lt.s32.totalorder %s112, 3
      %s114 = scalar_select %p113, %s112, 3
      %s115 = ssub.s32 %s110, %s114
      %p116 = scmp.eq.s32.totalorder %s115, 0
      %s118 = sadd.s32 %s117, 1
      %s119 = scalar_select %p116, %s117, %s118
      %p122 = pneg %p116
      %p123 = scmp.eq.s32.totalorder %s19, 3
      %p124 = por %p122, %p123
      %p125 = scmp.ne.s32.totalorder %s117, %s120
      %p126 = scmp.eq.s32.totalorder %s19, 0
      %p127 = por %p125, %p126
      %p128 = scmp.ne.s32.totalorder %s117, %s120
      %p129 = scmp.eq.s32.totalorder %s24, 3
      %p130 = por %p128, %p129
      %p131 = scmp.ne.s32.totalorder %s120, %s121
      %p132 = scmp.eq.s32.totalorder %s24, 0
      %p133 = por %p131, %p132
      %p134 = scmp.ne.s32.totalorder %s120, %s121
      %p135 = scmp.eq.s32.totalorder %s25, 3
      %p136 = por %p134, %p135
      %p138 = scmp.ne.s32.totalorder %s121, %s137
      %p139 = scmp.eq.s32.totalorder %s25, 0
      %p140 = por %p138, %p139
      %s141 = smul.u32 %s26, 2
      %s142 = sadd.s32 %s141, %s27
      %p143 = scmp.lt.s32.totalorder %s142, 3
      %s144 = scalar_select %p143, %s142, 3
      %s145 = smul.u32 %s38, 2
      %s146 = sadd.s32 %s145, %s34
      %p147 = scmp.lt.s32.totalorder %s146, 3
      %s148 = scalar_select %p147, %s146, 3
      %s149 = ssub.s32 %s144, %s148
      %p150 = scmp.eq.s32.totalorder %s149, 0
      %s152 = sadd.s32 %s151, 1
      %s153 = scalar_select %p150, %s151, %s152
      %p156 = pneg %p150
      %p157 = scmp.eq.s32.totalorder %s19, 3
      %p158 = por %p156, %p157
      %p159 = scmp.ne.s32.totalorder %s151, %s154
      %p160 = scmp.eq.s32.totalorder %s19, 0
      %p161 = por %p159, %p160
      %p162 = scmp.ne.s32.totalorder %s151, %s154
      %p163 = scmp.eq.s32.totalorder %s24, 3
      %p164 = por %p162, %p163
      %p165 = scmp.ne.s32.totalorder %s154, %s155
      %p166 = scmp.eq.s32.totalorder %s24, 0
      %p167 = por %p165, %p166
      %p168 = scmp.ne.s32.totalorder %s154, %s155
      %p169 = scmp.eq.s32.totalorder %s25, 3
      %p170 = por %p168, %p169
      %p172 = scmp.ne.s32.totalorder %s155, %s171
      %p173 = scmp.eq.s32.totalorder %s25, 0
      %p174 = por %p172, %p173
      %s175 = ssub.s32 %s26, %s38
      %p176 = scmp.eq.s32.totalorder %s175, 0
      %s178 = sadd.s32 %s177, 1
      %s179 = scalar_select %p176, %s177, %s178
      %p182 = pneg %p176
      %p183 = scmp.eq.s32.totalorder %s19, 3
      %p184 = por %p182, %p183
      %p185 = scmp.ne.s32.totalorder %s177, %s180
      %p186 = scmp.eq.s32.totalorder %s19, 0
      %p187 = por %p185, %p186
      %p188 = scmp.ne.s32.totalorder %s177, %s180
      %p189 = scmp.eq.s32.totalorder %s24, 3
      %p190 = por %p188, %p189
      %p191 = scmp.ne.s32.totalorder %s180, %s181
      %p192 = scmp.eq.s32.totalorder %s24, 0
      %p193 = por %p191, %p192
      %p194 = scmp.ne.s32.totalorder %s180, %s181
      %p195 = scmp.eq.s32.totalorder %s25, 3
      %p196 = por %p194, %p195
      %p198 = scmp.ne.s32.totalorder %s181, %s197
      %p199 = scmp.eq.s32.totalorder %s25, 0
      %p200 = por %p198, %p199
      %p201 = scmp.le.s32.totalorder 1, %s19
      %p202 = scmp.lt.s32.totalorder %s19, 5
      %p203 = pnand %p201, %p202
      %p204 = pneg %p203
      // Predicated region
      $region9: #{tpu_custom_call.1} parent=5 // pred_check
        _
      $region10: #{tpu_custom_call.1} parent=5 // pred_check_branch
        %206 = sbr.rel (%p203) target = $region12
      $region11: #{tpu_custom_call.1} parent=5 // pred_region
        %s207 = ssub.s32 %s19, 1
      $region12: #{tpu_custom_call.1} parent=5 // pred_fallthru
        _
      %p208 = scmp.lt.s32.totalorder %s19, 4
      // Predicated region
      $region13: #{tpu_custom_call.1} parent=5 // pred_check
        %p209 = pneg %p208
      $region14: #{tpu_custom_call.1} parent=5 // pred_check_branch
        %211 = sbr.rel (%p209) target = $region16
      $region15: #{tpu_custom_call.1} parent=5 // pred_region
        // Predicated region
        $region17: #{tpu_custom_call.1} parent=15 // pred_check
          %p212 = pneg %p59
        $region18: #{tpu_custom_call.1} parent=15 // pred_check_branch
          %214 = sbr.rel (%p212) target = $region20
        $region19: #{tpu_custom_call.1} parent=15 // pred_region
          %s215 = smul.u32 %s26, 2
          %s216 = sadd.s32 %s215, %s27
          %p217 = scmp.lt.s32.totalorder %s216, 3
          %s218 = scalar_select %p217, %s216, 3
          %s219 = smul.u32 8, %s218
          %s220 = ssub.s32 25, %s219
          %p221 = scmp.lt.s32.totalorder %s220, 8
          %s222 = scalar_select %p221, %s220, 8
          %s223 = smul.u32 128, %s222
          %p224 = scmp.lt.s32.totalorder %s219, 24
          %s225 = scalar_select %p224, %s219, 24
          %s226 = smul.addr %s225, 8
          %s227 = scalar_lea.vmem %s0, %s226
          %s228 = smul.u32 %s26, 2
          %s229 = sadd.s32 %s228, %s27
          %p230 = scmp.lt.s32.totalorder %s229, 3
          %s231 = scalar_select %p230, %s229, 3
          %s232 = smul.u32 8, %s231
          %s233 = ssub.s32 25, %s232
          %p234 = scmp.lt.s32.totalorder %s233, 8
          %s235 = scalar_select %p234, %s233, 8
          %s236 = smul.u32 128, %s235
        $region20: #{tpu_custom_call.1} parent=15 // pred_fallthru
          _
        // Predicated region
        $region21: #{tpu_custom_call.1} parent=15 // pred_check
          %p237 = pneg %p93
        $region22: #{tpu_custom_call.1} parent=15 // pred_check_branch
          %239 = sbr.rel (%p237) target = $region24
        $region23: #{tpu_custom_call.1} parent=15 // pred_region
          %s240 = sand.u32 %s83, 1
          %s241 = scalar_lea.sflag [#allocation3], %s240
          %s242 = sand.u32 %s83, 1
          %s243 = smul.addr %s242, 128
          %s244 = scalar_lea.vmem [#allocation2], %s243
          %s245 = smul.u32 %s26, 2
          %s246 = sadd.s32 %s245, %s27
          %p247 = scmp.lt.s32.totalorder %s246, 3
          %s248 = scalar_select %p247, %s246, 3
          %s249 = smul.u32 8, %s248
          %s250 = ssub.s32 25, %s249
          %p251 = scmp.lt.s32.totalorder %s250, 8
          %s252 = scalar_select %p251, %s250, 8
          %s253 = smul.u32 128, %s252
          %s254 = smul.u32 %s253, 2
          %s256 = ssub.s32 2048, %s254
          %257 = vsyncadd %s241, %s256
          %p258 = scmp.ne.s32.totalorder 0, %s254
          %s259 = smul.addr %s249, 2
          %s260 = smul.addr %s259, 128
          %s261 = scalar_lea.hbm %s1, %s260
          %s262 = smul.u32 16, %s252
          %s263 = sshll.u32 %s244, 4
          %s264 = int_to_ptr.vmem [resolvable:$true] %s263
          %s265 = sshll.u32 %s262, 4
          %269 = dma.hbm_to_vmem [thread:$0]  (%p258), %s261, %s265, %s264, %s241, 256, 256, 16
        $region24: #{tpu_custom_call.1} parent=15 // pred_fallthru
          _
        // Predicated region
        $region25: #{tpu_custom_call.1} parent=15 // pred_check
          %p270 = pneg %p127
        $region26: #{tpu_custom_call.1} parent=15 // pred_check_branch
          %272 = sbr.rel (%p270) target = $region28
        $region27: #{tpu_custom_call.1} parent=15 // pred_region
          %s273 = sand.u32 %s19, 1
          %s274 = scalar_lea.sflag [#allocation6], %s273
          %s275 = sand.u32 %s117, 1
          %s276 = smul.addr %s275, 128
          %s277 = scalar_lea.vmem [#allocation5], %s276
          %s278 = smul.u32 %s26, 2
          %s279 = sadd.s32 %s278, %s27
          %p280 = scmp.lt.s32.totalorder %s279, 3
          %s281 = scalar_select %p280, %s279, 3
          %s282 = smul.u32 8, %s281
          %s283 = ssub.s32 25, %s282
          %p284 = scmp.lt.s32.totalorder %s283, 8
          %s285 = scalar_select %p284, %s283, 8
          %s286 = smul.u32 128, %s285
          %s287 = smul.u32 %s286, 2
          %s289 = ssub.s32 2048, %s287
          %290 = vsyncadd %s274, %s289
          %p291 = scmp.ne.s32.totalorder 0, %s287
          %s292 = smul.addr %s282, 2
          %s293 = smul.addr %s292, 128
          %s294 = scalar_lea.hbm %s2, %s293
          %s295 = smul.u32 16, %s285
          %s296 = sshll.u32 %s277, 4
          %s297 = int_to_ptr.vmem [resolvable:$true] %s296
          %s298 = sshll.u32 %s295, 4
          %302 = dma.hbm_to_vmem [thread:$0]  (%p291), %s294, %s298, %s297, %s274, 256, 256, 16
        $region28: #{tpu_custom_call.1} parent=15 // pred_fallthru
          _
        // Predicated region
        $region29: #{tpu_custom_call.1} parent=15 // pred_check
          %p303 = pneg %p161
        $region30: #{tpu_custom_call.1} parent=15 // pred_check_branch
          %305 = sbr.rel (%p303) target = $region32
        $region31: #{tpu_custom_call.1} parent=15 // pred_region
          %s306 = sand.u32 %s19, 1
          %s307 = scalar_lea.sflag [#allocation6], %s306
          %s308 = sand.u32 %s151, 1
          %s309 = smul.addr %s308, 128
          %s310 = scalar_lea.vmem [#allocation7], %s309
          %s311 = smul.u32 %s26, 2
          %s312 = sadd.s32 %s311, %s27
          %p313 = scmp.lt.s32.totalorder %s312, 3
          %s314 = scalar_select %p313, %s312, 3
          %s315 = smul.u32 8, %s314
          %s316 = ssub.s32 25, %s315
          %p317 = scmp.lt.s32.totalorder %s316, 8
          %s318 = scalar_select %p317, %s316, 8
          %s319 = smul.u32 128, %s318
          %s320 = smul.u32 %s319, 2
          %s322 = ssub.s32 2048, %s320
          %323 = vsyncadd %s307, %s322
          %p324 = scmp.ne.s32.totalorder 0, %s320
          %s325 = smul.addr %s315, 2
          %s326 = smul.addr %s325, 128
          %s327 = scalar_lea.hbm %s3, %s326
          %s328 = smul.u32 16, %s318
          %s329 = sshll.u32 %s310, 4
          %s330 = int_to_ptr.vmem [resolvable:$true] %s329
          %s331 = sshll.u32 %s328, 4
          %335 = dma.hbm_to_vmem [thread:$0]  (%p324), %s327, %s331, %s330, %s307, 256, 256, 16
        $region32: #{tpu_custom_call.1} parent=15 // pred_fallthru
          _
      $region16: #{tpu_custom_call.1} parent=5 // pred_fallthru
        _
      %p336 = scmp.le.s32.totalorder 1, %s19
      %p337 = scmp.lt.s32.totalorder %s19, 5
      %p338 = pnand %p336, %p337
      %p339 = pneg %p338
      // Predicated region
      $region33: #{tpu_custom_call.1} parent=5 // pred_check
        _
      $region34: #{tpu_custom_call.1} parent=5 // pred_check_branch
        %341 = sbr.rel (%p338) target = $region36
      $region35: #{tpu_custom_call.1} parent=5 // pred_region
        %s342 = ssub.s32 %s19, 1
        %s343 = sand.u32 %s86, 1
        %s344 = scalar_lea.sflag [#allocation3], %s343
        %s345 = sand.u32 %s86, 1
        %s346 = smul.addr %s345, 128
        %s347 = scalar_lea.vmem [#allocation2], %s346
        // Predicated region
        $region37: #{tpu_custom_call.1} parent=35 // pred_check
          %p348 = pneg %p99
        $region38: #{tpu_custom_call.1} parent=35 // pred_check_branch
          %350 = sbr.rel (%p348) target = $region40
        $region39: #{tpu_custom_call.1} parent=35 // pred_region
          %351 = dma.done %s344, 2048
        $region40: #{tpu_custom_call.1} parent=35 // pred_fallthru
          _
        %s352 = sand.u32 %s24, 1
        %s353 = scalar_lea.sflag [#allocation6], %s352
        %s354 = sand.u32 %s120, 1
        %s355 = smul.addr %s354, 128
        %s356 = scalar_lea.vmem [#allocation5], %s355
        // Predicated region
        $region41: #{tpu_custom_call.1} parent=35 // pred_check
          %p357 = pneg %p133
        $region42: #{tpu_custom_call.1} parent=35 // pred_check_branch
          %359 = sbr.rel (%p357) target = $region44
        $region43: #{tpu_custom_call.1} parent=35 // pred_region
          %360 = dma.done %s353, 2048
        $region44: #{tpu_custom_call.1} parent=35 // pred_fallthru
          _
        %s361 = sand.u32 %s24, 1
        %s362 = scalar_lea.sflag [#allocation6], %s361
        %s363 = sand.u32 %s154, 1
        %s364 = smul.addr %s363, 128
        %s365 = scalar_lea.vmem [#allocation7], %s364
        // Predicated region
        $region45: #{tpu_custom_call.1} parent=35 // pred_check
          %p366 = pneg %p167
        $region46: #{tpu_custom_call.1} parent=35 // pred_check_branch
          %368 = sbr.rel (%p366) target = $region48
        $region47: #{tpu_custom_call.1} parent=35 // pred_region
          %369 = dma.done %s362, 2048
        $region48: #{tpu_custom_call.1} parent=35 // pred_fallthru
          _
        %s370 = smul.u32 %s28, 2
        %s371 = sadd.s32 %s370, %s29
        %p372 = scmp.lt.s32.totalorder %s371, 3
        %s373 = scalar_select %p372, %s371, 3
        %s374 = smul.u32 8, %s373
        %s375 = ssub.s32 25, %s374
        %p376 = scmp.lt.s32.totalorder %s375, 8
        %s377 = scalar_select %p376, %s375, 8
        %s378 = smul.u32 128, %s377
        %p379 = scmp.lt.s32.totalorder %s374, 24
        %s380 = scalar_select %p379, %s374, 24
        %s381 = smul.addr %s380, 8
        %s382 = scalar_lea.vmem %s0, %s381
        %p383 = pneg %p65
        %p384 = pneg %p62
        %s385 = sand.u32 %s86, 1
        %s386 = scalar_lea.sflag [#allocation3], %s385
        %s387 = sand.u32 %s86, 1
        %s388 = smul.addr %s387, 128
        %s389 = scalar_lea.vmem [#allocation2], %s388
        %p390 = pneg %p99
        %p391 = pneg %p96
        %s392 = sand.u32 %s24, 1
        %s393 = scalar_lea.sflag [#allocation6], %s392
        %s394 = sand.u32 %s120, 1
        %s395 = smul.addr %s394, 128
        %s396 = scalar_lea.vmem [#allocation5], %s395
        %p397 = pneg %p133
        %p398 = pneg %p130
        %s399 = sand.u32 %s24, 1
        %s400 = scalar_lea.sflag [#allocation6], %s399
        %s401 = sand.u32 %s154, 1
        %s402 = smul.addr %s401, 128
        %s403 = scalar_lea.vmem [#allocation7], %s402
        %p404 = pneg %p167
        %p405 = pneg %p164
        %p406 = pneg %p193
        %p407 = pneg %p190
        %s408 = sand.u32 %s180, 1
        %s409 = scalar_lea.sflag [#allocation4], %s408
        %s410 = sand.u32 %s180, 1
        %s411 = smul.addr %s410, 8
        %s412 = scalar_lea.vmem [#allocation8], %s411
        %s413 = smul.u32 %s28, 2
        %s414 = sadd.s32 %s413, %s29
        %p415 = scmp.lt.s32.totalorder %s414, 3
        %s416 = scalar_select %p415, %s414, 3
        %s417 = smul.u32 8, %s416
        %s418 = ssub.s32 25, %s417
        %p419 = scmp.lt.s32.totalorder %s418, 8
        %s420 = scalar_select %p419, %s418, 8
        %s421 = smul.u32 128, %s420
        %p422 = scmp.lt.s32.totalorder %s417, 24
        %s423 = scalar_select %p422, %s417, 24
        %s424 = smul.addr %s423, 8
        %s425 = scalar_lea.vmem %s0, %s424
        %s426 = smul.u32 %s28, 2
        %s427 = sadd.s32 %s426, %s29
        %p428 = scmp.lt.s32.totalorder %s427, 3
        %s429 = scalar_select %p428, %s427, 3
        %s430 = smul.u32 8, %s429
        %s431 = ssub.s32 25, %s430
        %p432 = scmp.lt.s32.totalorder %s431, 8
        %s433 = scalar_select %p432, %s431, 8
        %s434 = smul.u32 128, %s433
        %s435 = smul.u32 %s28, 2
        %s436 = sadd.s32 %s435, %s29
        %p437 = scmp.lt.s32.totalorder %s436, 3
        %s438 = scalar_select %p437, %s436, 3
        %s439 = smul.u32 8, %s438
        %s440 = ssub.s32 25, %s439
        %p441 = scmp.lt.s32.totalorder %s440, 8
        %s442 = scalar_select %p441, %s440, 8
        %s443 = smul.u32 128, %s442
        %s444 = smul.u32 %s443, 2
        %s445 = smul.u32 %s28, 2
        %s446 = sadd.s32 %s445, %s29
        %p447 = scmp.lt.s32.totalorder %s446, 3
        %s448 = scalar_select %p447, %s446, 3
        %s449 = smul.u32 8, %s448
        %s450 = ssub.s32 25, %s449
        %p451 = scmp.lt.s32.totalorder %s450, 8
        %s452 = scalar_select %p451, %s450, 8
        %s453 = smul.u32 128, %s452
        %s454 = smul.u32 %s453, 2
        %s455 = smul.u32 %s28, 2
        %s456 = sadd.s32 %s455, %s29
        %p457 = scmp.lt.s32.totalorder %s456, 3
        %s458 = scalar_select %p457, %s456, 3
        %s459 = smul.u32 8, %s458
        %s460 = ssub.s32 25, %s459
        %p461 = scmp.lt.s32.totalorder %s460, 8
        %s462 = scalar_select %p461, %s460, 8
        %s463 = smul.u32 128, %s462
        %s464 = smul.u32 %s463, 2
        %p465 = scmp.eq.s32.totalorder %s29, 0
        // Predicated region
        $region49: #{tpu_custom_call.1} parent=35 // pred_check
          %p466 = pneg %p465
        $region50: #{tpu_custom_call.1} parent=35 // pred_check_branch
          %468 = sbr.rel (%p466) target = $region52
        $region51: #{tpu_custom_call.1} parent=35 // pred_region
          %469 = vst [vmem:[%s412] sm:$0xff] 0.0
        $region52: #{tpu_custom_call.1} parent=35 // pred_fallthru
          _
        %s470 = smul.u32 %s28, 2
        %s471 = sadd.s32 %s470, %s29
        %s472 = smul.u32 %s471, 64
        %v473 = vlaneseq
        %v474 = vshrl.u32 %v473, 7
        %v475 = vadd.s32 %v474, 8
        %v476 = vadd.s32 %v474, 16
        %v477 = vadd.s32 %v474, 24
        %v478 = vadd.s32 %v474, 32
        %v479 = vadd.s32 %v474, 40
        %v480 = vadd.s32 %v474, 48
        %v481 = vadd.s32 %v474, 56
        %v482 = vstv %s472
        %v483 = vadd.s32 %v482, %v474
        %v484 = vadd.s32 %v482, %v475
        %v485 = vadd.s32 %v482, %v476
        %v486 = vadd.s32 %v482, %v477
        %v487 = vadd.s32 %v482, %v478
        %v488 = vadd.s32 %v482, %v479
        %v489 = vadd.s32 %v482, %v480
        %v490 = vadd.s32 %v482, %v481
        %vm491 = vcmp.lt.s32.totalorder %v483, 200
        %vm492 = vcmp.lt.s32.totalorder %v484, 200
        %vm493 = vcmp.lt.s32.totalorder %v485, 200
        %vm494 = vcmp.lt.s32.totalorder %v486, 200
        %vm495 = vcmp.lt.s32.totalorder %v487, 200
        %vm496 = vcmp.lt.s32.totalorder %v488, 200
        %vm497 = vcmp.lt.s32.totalorder %v489, 200
        %vm498 = vcmp.lt.s32.totalorder %v490, 200
        %v499 = vsel %vm491, 1, 0
        %v500 = vsel %vm492, 1, 0
        %v501 = vsel %vm493, 1, 0
        %v502 = vsel %vm494, 1, 0
        %v503 = vsel %vm495, 1, 0
        %v504 = vsel %vm496, 1, 0
        %v505 = vsel %vm497, 1, 0
        %v506 = vsel %vm498, 1, 0
        %v507 = vcvt.s32.f32 %v499
        %v508 = vcvt.s32.f32 %v500
        %v509 = vcvt.s32.f32 %v501
        %v510 = vcvt.s32.f32 %v502
        %v511 = vcvt.s32.f32 %v503
        %v512 = vcvt.s32.f32 %v504
        %v513 = vcvt.s32.f32 %v505
        %v514 = vcvt.s32.f32 %v506
        %v515 = vld [vmem:[%s425] sm:$0xff]
        %v516 = vld [vmem:[%s425 + $0x8] sm:$0xff]
        %v517 = vld [vmem:[%s425 + $0x10] sm:$0xff]
        %v518 = vld [vmem:[%s425 + $0x18] sm:$0xff]
        %v519 = vld [vmem:[%s425 + $0x20] sm:$0xff]
        %v520 = vld [vmem:[%s425 + $0x28] sm:$0xff]
        %v521 = vld [vmem:[%s425 + $0x30] sm:$0xff]
        %v522 = vld [vmem:[%s425 + $0x38] sm:$0xff]
        %v523 = vld [vmem:[%s347] sm:$0xff]
        %v524 = vld [vmem:[%s347 + $0x8] sm:$0xff]
        %v525 = vld [vmem:[%s347 + $0x10] sm:$0xff]
        %v526 = vld [vmem:[%s347 + $0x18] sm:$0xff]
        %v527 = vld [vmem:[%s347 + $0x20] sm:$0xff]
        %v528 = vld [vmem:[%s347 + $0x28] sm:$0xff]
        %v529 = vld [vmem:[%s347 + $0x30] sm:$0xff]
        %v530 = vld [vmem:[%s347 + $0x38] sm:$0xff]
        %v531 = vld [vmem:[%s347 + $0x40] sm:$0xff]
        %v532 = vld [vmem:[%s347 + $0x48] sm:$0xff]
        %v533 = vld [vmem:[%s347 + $0x50] sm:$0xff]
        %v534 = vld [vmem:[%s347 + $0x58] sm:$0xff]
        %v535 = vld [vmem:[%s347 + $0x60] sm:$0xff]
        %v536 = vld [vmem:[%s347 + $0x68] sm:$0xff]
        %v537 = vld [vmem:[%s347 + $0x70] sm:$0xff]
        %v538 = vld [vmem:[%s347 + $0x78] sm:$0xff]
        %v539 = vlaneseq
        %v540 = vand.u32 %v539, 127
        %v541 = vadd.s32 %v540, 128
        %542 = vset.pattern.permute.xlu0 0
        %543 = vperm.xlu0 %542, %v515
        %v544 = vpop.permute.xlu0 %543
        %545 = vset.pattern.permute.xlu0 0
        %546 = vperm.xlu0 %545, %v516
        %v547 = vpop.permute.xlu0 %546
        %548 = vset.pattern.permute.xlu0 0
        %549 = vperm.xlu0 %548, %v517
        %v550 = vpop.permute.xlu0 %549
        %551 = vset.pattern.permute.xlu0 0
        %552 = vperm.xlu0 %551, %v518
        %v553 = vpop.permute.xlu0 %552
        %554 = vset.pattern.permute.xlu0 0
        %555 = vperm.xlu0 %554, %v519
        %v556 = vpop.permute.xlu0 %555
        %557 = vset.pattern.permute.xlu0 0
        %558 = vperm.xlu0 %557, %v520
        %v559 = vpop.permute.xlu0 %558
        %560 = vset.pattern.permute.xlu0 0
        %561 = vperm.xlu0 %560, %v521
        %v562 = vpop.permute.xlu0 %561
        %563 = vset.pattern.permute.xlu0 0
        %564 = vperm.xlu0 %563, %v522
        %v565 = vpop.permute.xlu0 %564
        %vm566 = vcmp.eq.s32.totalorder %v540, %v544
        %vm567 = vcmp.eq.s32.totalorder %v541, %v544
        %vm568 = vcmp.eq.s32.totalorder %v540, %v547
        %vm569 = vcmp.eq.s32.totalorder %v541, %v547
        %vm570 = vcmp.eq.s32.totalorder %v540, %v550
        %vm571 = vcmp.eq.s32.totalorder %v541, %v550
        %vm572 = vcmp.eq.s32.totalorder %v540, %v553
        %vm573 = vcmp.eq.s32.totalorder %v541, %v553
        %vm574 = vcmp.eq.s32.totalorder %v540, %v556
        %vm575 = vcmp.eq.s32.totalorder %v541, %v556
        %vm576 = vcmp.eq.s32.totalorder %v540, %v559
        %vm577 = vcmp.eq.s32.totalorder %v541, %v559
        %vm578 = vcmp.eq.s32.totalorder %v540, %v562
        %vm579 = vcmp.eq.s32.totalorder %v541, %v562
        %vm580 = vcmp.eq.s32.totalorder %v540, %v565
        %vm581 = vcmp.eq.s32.totalorder %v541, %v565
        %vm582 = vcmask 588800
        %v583 = vsel %vm582, %v524, -inf
        %v584 = vmax.f32 %v523, %v583
        %585 = vmax.xlane.f32.xlu0 %v584
        %v586 = vpop.xlane.xlu0 %585
        %v587 = vsel %vm582, %v526, -inf
        %v588 = vmax.f32 %v525, %v587
        %589 = vmax.xlane.f32.xlu0 %v588
        %v590 = vpop.xlane.xlu0 %589
        %v591 = vsel %vm582, %v528, -inf
        %v592 = vmax.f32 %v527, %v591
        %593 = vmax.xlane.f32.xlu0 %v592
        %v594 = vpop.xlane.xlu0 %593
        %v595 = vsel %vm582, %v530, -inf
        %v596 = vmax.f32 %v529, %v595
        %597 = vmax.xlane.f32.xlu0 %v596
        %v598 = vpop.xlane.xlu0 %597
        %v599 = vsel %vm582, %v532, -inf
        %v600 = vmax.f32 %v531, %v599
        %601 = vmax.xlane.f32.xlu0 %v600
        %v602 = vpop.xlane.xlu0 %601
        %v603 = vsel %vm582, %v534, -inf
        %v604 = vmax.f32 %v533, %v603
        %605 = vmax.xlane.f32.xlu0 %v604
        %v606 = vpop.xlane.xlu0 %605
        %v607 = vsel %vm582, %v536, -inf
        %v608 = vmax.f32 %v535, %v607
        %609 = vmax.xlane.f32.xlu0 %v608
        %v610 = vpop.xlane.xlu0 %609
        %v611 = vsel %vm582, %v538, -inf
        %v612 = vmax.f32 %v537, %v611
        %613 = vmax.xlane.f32.xlu0 %v612
        %v614 = vpop.xlane.xlu0 %613
        %v615 = vsub.f32 %v523, %v586
        %v616 = vsub.f32 %v524, %v586
        %v617 = vsub.f32 %v525, %v590
        %v618 = vsub.f32 %v526, %v590
        %v619 = vsub.f32 %v527, %v594
        %v620 = vsub.f32 %v528, %v594
        %v621 = vsub.f32 %v529, %v598
        %v622 = vsub.f32 %v530, %v598
        %v623 = vsub.f32 %v531, %v602
        %v624 = vsub.f32 %v532, %v602
        %v625 = vsub.f32 %v533, %v606
        %v626 = vsub.f32 %v534, %v606
        %v627 = vsub.f32 %v535, %v610
        %v628 = vsub.f32 %v536, %v610
        %v629 = vsub.f32 %v537, %v614
        %v630 = vsub.f32 %v538, %v614
        %v631 = vmul.f32 %v615, 1.442695
        %v632 = vpow.pop %v631
        %v633 = vmul.f32 %v616, 1.442695
        %v634 = vpow.pop %v633
        %v635 = vmul.f32 %v617, 1.442695
        %v636 = vpow.pop %v635
        %v637 = vmul.f32 %v618, 1.442695
        %v638 = vpow.pop %v637
        %v639 = vmul.f32 %v619, 1.442695
        %v640 = vpow.pop %v639
        %v641 = vmul.f32 %v620, 1.442695
        %v642 = vpow.pop %v641
        %v643 = vmul.f32 %v621, 1.442695
        %v644 = vpow.pop %v643
        %v645 = vmul.f32 %v622, 1.442695
        %v646 = vpow.pop %v645
        %v647 = vmul.f32 %v623, 1.442695
        %v648 = vpow.pop %v647
        %v649 = vmul.f32 %v624, 1.442695
        %v650 = vpow.pop %v649
        %v651 = vmul.f32 %v625, 1.442695
        %v652 = vpow.pop %v651
        %v653 = vmul.f32 %v626, 1.442695
        %v654 = vpow.pop %v653
        %v655 = vmul.f32 %v627, 1.442695
        %v656 = vpow.pop %v655
        %v657 = vmul.f32 %v628, 1.442695
        %v658 = vpow.pop %v657
        %v659 = vmul.f32 %v629, 1.442695
        %v660 = vpow.pop %v659
        %v661 = vmul.f32 %v630, 1.442695
        %v662 = vpow.pop %v661
        %v663 = vsel %vm582, %v634, 0.0
        %v664 = vadd.f32 %v632, %v663
        %665 = vadd.xlane.f32.xlu0 %v664
        %v666 = vpop.xlane.xlu0 %665
        %v667 = vsel %vm582, %v638, 0.0
        %v668 = vadd.f32 %v636, %v667
        %669 = vadd.xlane.f32.xlu0 %v668
        %v670 = vpop.xlane.xlu0 %669
        %v671 = vsel %vm582, %v642, 0.0
        %v672 = vadd.f32 %v640, %v671
        %673 = vadd.xlane.f32.xlu0 %v672
        %v674 = vpop.xlane.xlu0 %673
        %v675 = vsel %vm582, %v646, 0.0
        %v676 = vadd.f32 %v644, %v675
        %677 = vadd.xlane.f32.xlu0 %v676
        %v678 = vpop.xlane.xlu0 %677
        %v679 = vsel %vm582, %v650, 0.0
        %v680 = vadd.f32 %v648, %v679
        %681 = vadd.xlane.f32.xlu0 %v680
        %v682 = vpop.xlane.xlu0 %681
        %v683 = vsel %vm582, %v654, 0.0
        %v684 = vadd.f32 %v652, %v683
        %685 = vadd.xlane.f32.xlu0 %v684
        %v686 = vpop.xlane.xlu0 %685
        %v687 = vsel %vm582, %v658, 0.0
        %v688 = vadd.f32 %v656, %v687
        %689 = vadd.xlane.f32.xlu0 %v688
        %v690 = vpop.xlane.xlu0 %689
        %v691 = vsel %vm582, %v662, 0.0
        %v692 = vadd.f32 %v660, %v691
        %693 = vadd.xlane.f32.xlu0 %v692
        %v694 = vpop.xlane.xlu0 %693
        %v695 = vlog2.pop %v666
        %v696 = vmul.f32 %v695, 0.6931472
        %v697 = vlog2.pop %v670
        %v698 = vmul.f32 %v697, 0.6931472
        %v699 = vlog2.pop %v674
        %v700 = vmul.f32 %v699, 0.6931472
        %v701 = vlog2.pop %v678
        %v702 = vmul.f32 %v701, 0.6931472
        %v703 = vlog2.pop %v682
        %v704 = vmul.f32 %v703, 0.6931472
        %v705 = vlog2.pop %v686
        %v706 = vmul.f32 %v705, 0.6931472
        %v707 = vlog2.pop %v690
        %v708 = vmul.f32 %v707, 0.6931472
        %v709 = vlog2.pop %v694
        %v710 = vmul.f32 %v709, 0.6931472
        %v711 = vadd.f32 %v696, %v586
        %v712 = vadd.f32 %v698, %v590
        %v713 = vadd.f32 %v700, %v594
        %v714 = vadd.f32 %v702, %v598
        %v715 = vadd.f32 %v704, %v602
        %v716 = vadd.f32 %v706, %v606
        %v717 = vadd.f32 %v708, %v610
        %v718 = vadd.f32 %v710, %v614
        %v719 = vsel %vm566, %v523, 0.0
        %v720 = vsel %vm567, %v524, 0.0
        %v721 = vsel %vm568, %v525, 0.0
        %v722 = vsel %vm569, %v526, 0.0
        %v723 = vsel %vm570, %v527, 0.0
        %v724 = vsel %vm571, %v528, 0.0
        %v725 = vsel %vm572, %v529, 0.0
        %v726 = vsel %vm573, %v530, 0.0
        %v727 = vsel %vm574, %v531, 0.0
        %v728 = vsel %vm575, %v532, 0.0
        %v729 = vsel %vm576, %v533, 0.0
        %v730 = vsel %vm577, %v534, 0.0
        %v731 = vsel %vm578, %v535, 0.0
        %v732 = vsel %vm579, %v536, 0.0
        %v733 = vsel %vm580, %v537, 0.0
        %v734 = vsel %vm581, %v538, 0.0
        %v735 = vsel %vm582, %v720, 0.0
        %v736 = vadd.f32 %v719, %v735
        %737 = vadd.xlane.f32.xlu0 %v736
        %v738 = vpop.xlane.xlu0 %737
        %v739 = vsel %vm582, %v722, 0.0
        %v740 = vadd.f32 %v721, %v739
        %741 = vadd.xlane.f32.xlu0 %v740
        %v742 = vpop.xlane.xlu0 %741
        %v743 = vsel %vm582, %v724, 0.0
        %v744 = vadd.f32 %v723, %v743
        %745 = vadd.xlane.f32.xlu0 %v744
        %v746 = vpop.xlane.xlu0 %745
        %v747 = vsel %vm582, %v726, 0.0
        %v748 = vadd.f32 %v725, %v747
        %749 = vadd.xlane.f32.xlu0 %v748
        %v750 = vpop.xlane.xlu0 %749
        %v751 = vsel %vm582, %v728, 0.0
        %v752 = vadd.f32 %v727, %v751
        %753 = vadd.xlane.f32.xlu0 %v752
        %v754 = vpop.xlane.xlu0 %753
        %v755 = vsel %vm582, %v730, 0.0
        %v756 = vadd.f32 %v729, %v755
        %757 = vadd.xlane.f32.xlu0 %v756
        %v758 = vpop.xlane.xlu0 %757
        %v759 = vsel %vm582, %v732, 0.0
        %v760 = vadd.f32 %v731, %v759
        %761 = vadd.xlane.f32.xlu0 %v760
        %v762 = vpop.xlane.xlu0 %761
        %v763 = vsel %vm582, %v734, 0.0
        %v764 = vadd.f32 %v733, %v763
        %765 = vadd.xlane.f32.xlu0 %v764
        %v766 = vpop.xlane.xlu0 %765
        %v767 = vsub.f32 %v711, %v738
        %v768 = vsub.f32 %v712, %v742
        %v769 = vsub.f32 %v713, %v746
        %v770 = vsub.f32 %v714, %v750
        %v771 = vsub.f32 %v715, %v754
        %v772 = vsub.f32 %v716, %v758
        %v773 = vsub.f32 %v717, %v762
        %v774 = vsub.f32 %v718, %v766
        %v775 = vsel %vm491, %v767, 0.0
        %v776 = vsel %vm492, %v768, 0.0
        %v777 = vsel %vm493, %v769, 0.0
        %v778 = vsel %vm494, %v770, 0.0
        %v779 = vsel %vm495, %v771, 0.0
        %v780 = vsel %vm496, %v772, 0.0
        %v781 = vsel %vm497, %v773, 0.0
        %v782 = vsel %vm498, %v774, 0.0
        %vm783 = vcmask 7168
        %v784 = vsel %vm783, %v775, 0.0
        %v785 = vsel %vm783, %v776, 0.0
        %v786 = vadd.f32 %v784, %v785
        %v787 = vsel %vm783, %v777, 0.0
        %v788 = vadd.f32 %v786, %v787
        %v789 = vsel %vm783, %v778, 0.0
        %v790 = vadd.f32 %v788, %v789
        %v791 = vsel %vm783, %v779, 0.0
        %v792 = vadd.f32 %v790, %v791
        %v793 = vsel %vm783, %v780, 0.0
        %v794 = vadd.f32 %v792, %v793
        %v795 = vsel %vm783, %v781, 0.0
        %v796 = vadd.f32 %v794, %v795
        %v797 = vsel %vm783, %v782, 0.0
        %v798 = vadd.f32 %v796, %v797
        %799 = vadd.xlane.f32.xlu0 %v798
        %v800 = vpop.xlane.xlu0 %799
        %v801 = vrot.slane %v800, 4
        %v802 = vadd.f32 %v800, %v801
        %v803 = vrot.slane %v802, 2
        %v804 = vadd.f32 %v802, %v803
        %v805 = vrot.slane %v804, 1
        %v806 = vadd.f32 %v804, %v805
        %s807 = vtos %v806
        %vm808 = vcmp.eq.f32.partialorder %v523, %v586
        %vm809 = vcmp.eq.f32.partialorder %v524, %v586
        %vm810 = vcmp.eq.f32.partialorder %v525, %v590
        %vm811 = vcmp.eq.f32.partialorder %v526, %v590
        %vm812 = vcmp.eq.f32.partialorder %v527, %v594
        %vm813 = vcmp.eq.f32.partialorder %v528, %v594
        %vm814 = vcmp.eq.f32.partialorder %v529, %v598
        %vm815 = vcmp.eq.f32.partialorder %v530, %v598
        %vm816 = vcmp.eq.f32.partialorder %v531, %v602
        %vm817 = vcmp.eq.f32.partialorder %v532, %v602
        %vm818 = vcmp.eq.f32.partialorder %v533, %v606
        %vm819 = vcmp.eq.f32.partialorder %v534, %v606
        %vm820 = vcmp.eq.f32.partialorder %v535, %v610
        %vm821 = vcmp.eq.f32.partialorder %v536, %v610
        %vm822 = vcmp.eq.f32.partialorder %v537, %v614
        %vm823 = vcmp.eq.f32.partialorder %v538, %v614
        %v824 = vsel %vm808, %v540, 200
        %v825 = vsel %vm809, %v541, 200
        %v826 = vsel %vm810, %v540, 200
        %v827 = vsel %vm811, %v541, 200
        %v828 = vsel %vm812, %v540, 200
        %v829 = vsel %vm813, %v541, 200
        %v830 = vsel %vm814, %v540, 200
        %v831 = vsel %vm815, %v541, 200
        %v832 = vsel %vm816, %v540, 200
        %v833 = vsel %vm817, %v541, 200
        %v834 = vsel %vm818, %v540, 200
        %v835 = vsel %vm819, %v541, 200
        %v836 = vsel %vm820, %v540, 200
        %v837 = vsel %vm821, %v541, 200
        %v838 = vsel %vm822, %v540, 200
        %v839 = vsel %vm823, %v541, 200
        %v840 = vsel %vm582, %v825, 2147483647
        %vm841 = vcmp.lt.s32.totalorder %v824, %v840
        %v842 = vsel %vm841, %v824, %v840
        %v843 = vand.u32 %v842, 65535
        %v844 = vshra.s32 %v842, 16
        %v845 = vcvt.s32.f32 %v843
        %v846 = vcvt.s32.f32 %v844
        %847 = vmin.xlane.f32.xlu0 %v846
        %v848 = vpop.xlane.xlu0 %847
        %vm849 = vcmp.eq.f32.partialorder %v846, %v848
        %v850 = vsel %vm849, %v845, inf
        %851 = vmin.xlane.f32.xlu0 %v850
        %v852 = vpop.xlane.xlu0 %851
        %v853 = vcvt.f32.s32 %v852
        %v854 = vcvt.f32.s32 %v848
        %v855 = vshll.u32 %v854, 16
        %v856 = vadd.s32 %v855, %v853
        %v857 = vsel %vm582, %v827, 2147483647
        %vm858 = vcmp.lt.s32.totalorder %v826, %v857
        %v859 = vsel %vm858, %v826, %v857
        %v860 = vand.u32 %v859, 65535
        %v861 = vshra.s32 %v859, 16
        %v862 = vcvt.s32.f32 %v860
        %v863 = vcvt.s32.f32 %v861
        %864 = vmin.xlane.f32.xlu0 %v863
        %v865 = vpop.xlane.xlu0 %864
        %vm866 = vcmp.eq.f32.partialorder %v863, %v865
        %v867 = vsel %vm866, %v862, inf
        %868 = vmin.xlane.f32.xlu0 %v867
        %v869 = vpop.xlane.xlu0 %868
        %v870 = vcvt.f32.s32 %v869
        %v871 = vcvt.f32.s32 %v865
        %v872 = vshll.u32 %v871, 16
        %v873 = vadd.s32 %v872, %v870
        %v874 = vsel %vm582, %v829, 2147483647
        %vm875 = vcmp.lt.s32.totalorder %v828, %v874
        %v876 = vsel %vm875, %v828, %v874
        %v877 = vand.u32 %v876, 65535
        %v878 = vshra.s32 %v876, 16
        %v879 = vcvt.s32.f32 %v877
        %v880 = vcvt.s32.f32 %v878
        %881 = vmin.xlane.f32.xlu0 %v880
        %v882 = vpop.xlane.xlu0 %881
        %vm883 = vcmp.eq.f32.partialorder %v880, %v882
        %v884 = vsel %vm883, %v879, inf
        %885 = vmin.xlane.f32.xlu0 %v884
        %v886 = vpop.xlane.xlu0 %885
        %v887 = vcvt.f32.s32 %v886
        %v888 = vcvt.f32.s32 %v882
        %v889 = vshll.u32 %v888, 16
        %v890 = vadd.s32 %v889, %v887
        %v891 = vsel %vm582, %v831, 2147483647
        %vm892 = vcmp.lt.s32.totalorder %v830, %v891
        %v893 = vsel %vm892, %v830, %v891
        %v894 = vand.u32 %v893, 65535
        %v895 = vshra.s32 %v893, 16
        %v896 = vcvt.s32.f32 %v894
        %v897 = vcvt.s32.f32 %v895
        %898 = vmin.xlane.f32.xlu0 %v897
        %v899 = vpop.xlane.xlu0 %898
        %vm900 = vcmp.eq.f32.partialorder %v897, %v899
        %v901 = vsel %vm900, %v896, inf
        %902 = vmin.xlane.f32.xlu0 %v901
        %v903 = vpop.xlane.xlu0 %902
        %v904 = vcvt.f32.s32 %v903
        %v905 = vcvt.f32.s32 %v899
        %v906 = vshll.u32 %v905, 16
        %v907 = vadd.s32 %v906, %v904
        %v908 = vsel %vm582, %v833, 2147483647
        %vm909 = vcmp.lt.s32.totalorder %v832, %v908
        %v910 = vsel %vm909, %v832, %v908
        %v911 = vand.u32 %v910, 65535
        %v912 = vshra.s32 %v910, 16
        %v913 = vcvt.s32.f32 %v911
        %v914 = vcvt.s32.f32 %v912
        %915 = vmin.xlane.f32.xlu0 %v914
        %v916 = vpop.xlane.xlu0 %915
        %vm917 = vcmp.eq.f32.partialorder %v914, %v916
        %v918 = vsel %vm917, %v913, inf
        %919 = vmin.xlane.f32.xlu0 %v918
        %v920 = vpop.xlane.xlu0 %919
        %v921 = vcvt.f32.s32 %v920
        %v922 = vcvt.f32.s32 %v916
        %v923 = vshll.u32 %v922, 16
        %v924 = vadd.s32 %v923, %v921
        %v925 = vsel %vm582, %v835, 2147483647
        %vm926 = vcmp.lt.s32.totalorder %v834, %v925
        %v927 = vsel %vm926, %v834, %v925
        %v928 = vand.u32 %v927, 65535
        %v929 = vshra.s32 %v927, 16
        %v930 = vcvt.s32.f32 %v928
        %v931 = vcvt.s32.f32 %v929
        %932 = vmin.xlane.f32.xlu0 %v931
        %v933 = vpop.xlane.xlu0 %932
        %vm934 = vcmp.eq.f32.partialorder %v931, %v933
        %v935 = vsel %vm934, %v930, inf
        %936 = vmin.xlane.f32.xlu0 %v935
        %v937 = vpop.xlane.xlu0 %936
        %v938 = vcvt.f32.s32 %v937
        %v939 = vcvt.f32.s32 %v933
        %v940 = vshll.u32 %v939, 16
        %v941 = vadd.s32 %v940, %v938
        %v942 = vsel %vm582, %v837, 2147483647
        %vm943 = vcmp.lt.s32.totalorder %v836, %v942
        %v944 = vsel %vm943, %v836, %v942
        %v945 = vand.u32 %v944, 65535
        %v946 = vshra.s32 %v944, 16
        %v947 = vcvt.s32.f32 %v945
        %v948 = vcvt.s32.f32 %v946
        %949 = vmin.xlane.f32.xlu0 %v948
        %v950 = vpop.xlane.xlu0 %949
        %vm951 = vcmp.eq.f32.partialorder %v948, %v950
        %v952 = vsel %vm951, %v947, inf
        %953 = vmin.xlane.f32.xlu0 %v952
        %v954 = vpop.xlane.xlu0 %953
        %v955 = vcvt.f32.s32 %v954
        %v956 = vcvt.f32.s32 %v950
        %v957 = vshll.u32 %v956, 16
        %v958 = vadd.s32 %v957, %v955
        %v959 = vsel %vm582, %v839, 2147483647
        %vm960 = vcmp.lt.s32.totalorder %v838, %v959
        %v961 = vsel %vm960, %v838, %v959
        %v962 = vand.u32 %v961, 65535
        %v963 = vshra.s32 %v961, 16
        %v964 = vcvt.s32.f32 %v962
        %v965 = vcvt.s32.f32 %v963
        %966 = vmin.xlane.f32.xlu0 %v965
        %v967 = vpop.xlane.xlu0 %966
        %vm968 = vcmp.eq.f32.partialorder %v965, %v967
        %v969 = vsel %vm968, %v964, inf
        %970 = vmin.xlane.f32.xlu0 %v969
        %v971 = vpop.xlane.xlu0 %970
        %v972 = vcvt.f32.s32 %v971
        %v973 = vcvt.f32.s32 %v967
        %v974 = vshll.u32 %v973, 16
        %v975 = vadd.s32 %v974, %v972
        %vm976 = vcmp.eq.s32.totalorder %v856, %v515
        %vm977 = vcmp.eq.s32.totalorder %v873, %v516
        %vm978 = vcmp.eq.s32.totalorder %v890, %v517
        %vm979 = vcmp.eq.s32.totalorder %v907, %v518
        %vm980 = vcmp.eq.s32.totalorder %v924, %v519
        %vm981 = vcmp.eq.s32.totalorder %v941, %v520
        %vm982 = vcmp.eq.s32.totalorder %v958, %v521
        %vm983 = vcmp.eq.s32.totalorder %v975, %v522
        %v984 = vsel %vm976, 1, 0
        %v985 = vsel %vm977, 1, 0
        %v986 = vsel %vm978, 1, 0
        %v987 = vsel %vm979, 1, 0
        %v988 = vsel %vm980, 1, 0
        %v989 = vsel %vm981, 1, 0
        %v990 = vsel %vm982, 1, 0
        %v991 = vsel %vm983, 1, 0
        %v992 = vcvt.s32.f32 %v984
        %v993 = vcvt.s32.f32 %v985
        %v994 = vcvt.s32.f32 %v986
        %v995 = vcvt.s32.f32 %v987
        %v996 = vcvt.s32.f32 %v988
        %v997 = vcvt.s32.f32 %v989
        %v998 = vcvt.s32.f32 %v990
        %v999 = vcvt.s32.f32 %v991
        %v1000 = vmul.f32 %v992, %v507
        %v1001 = vmul.f32 %v993, %v508
        %v1002 = vmul.f32 %v994, %v509
        %v1003 = vmul.f32 %v995, %v510
        %v1004 = vmul.f32 %v996, %v511
        %v1005 = vmul.f32 %v997, %v512
        %v1006 = vmul.f32 %v998, %v513
        %v1007 = vmul.f32 %v999, %v514
        %v1008 = vsel %vm783, %v1000, 0.0
        %v1009 = vsel %vm783, %v1001, 0.0
        %v1010 = vadd.f32 %v1008, %v1009
        %v1011 = vsel %vm783, %v1002, 0.0
        %v1012 = vadd.f32 %v1010, %v1011
        %v1013 = vsel %vm783, %v1003, 0.0
        %v1014 = vadd.f32 %v1012, %v1013
        %v1015 = vsel %vm783, %v1004, 0.0
        %v1016 = vadd.f32 %v1014, %v1015
        %v1017 = vsel %vm783, %v1005, 0.0
        %v1018 = vadd.f32 %v1016, %v1017
        %v1019 = vsel %vm783, %v1006, 0.0
        %v1020 = vadd.f32 %v1018, %v1019
        %v1021 = vsel %vm783, %v1007, 0.0
        %v1022 = vadd.f32 %v1020, %v1021
        %1023 = vadd.xlane.f32.xlu0 %v1022
        %v1024 = vpop.xlane.xlu0 %1023
        %v1025 = vrot.slane %v1024, 4
        %v1026 = vadd.f32 %v1024, %v1025
        %v1027 = vrot.slane %v1026, 2
        %v1028 = vadd.f32 %v1026, %v1027
        %v1029 = vrot.slane %v1028, 1
        %v1030 = vadd.f32 %v1028, %v1029
        %s1031 = vtos %v1030
        %v1032 = vld [vmem:[%s356] sm:$0xff]
        %v1033 = vld [vmem:[%s356 + $0x8] sm:$0xff]
        %v1034 = vld [vmem:[%s356 + $0x10] sm:$0xff]
        %v1035 = vld [vmem:[%s356 + $0x18] sm:$0xff]
        %v1036 = vld [vmem:[%s356 + $0x20] sm:$0xff]
        %v1037 = vld [vmem:[%s356 + $0x28] sm:$0xff]
        %v1038 = vld [vmem:[%s356 + $0x30] sm:$0xff]
        %v1039 = vld [vmem:[%s356 + $0x38] sm:$0xff]
        %v1040 = vld [vmem:[%s356 + $0x40] sm:$0xff]
        %v1041 = vld [vmem:[%s356 + $0x48] sm:$0xff]
        %v1042 = vld [vmem:[%s356 + $0x50] sm:$0xff]
        %v1043 = vld [vmem:[%s356 + $0x58] sm:$0xff]
        %v1044 = vld [vmem:[%s356 + $0x60] sm:$0xff]
        %v1045 = vld [vmem:[%s356 + $0x68] sm:$0xff]
        %v1046 = vld [vmem:[%s356 + $0x70] sm:$0xff]
        %v1047 = vld [vmem:[%s356 + $0x78] sm:$0xff]
        %v1048 = vsel %vm582, %v1033, -inf
        %v1049 = vmax.f32 %v1032, %v1048
        %1050 = vmax.xlane.f32.xlu0 %v1049
        %v1051 = vpop.xlane.xlu0 %1050
        %v1052 = vsel %vm582, %v1035, -inf
        %v1053 = vmax.f32 %v1034, %v1052
        %1054 = vmax.xlane.f32.xlu0 %v1053
        %v1055 = vpop.xlane.xlu0 %1054
        %v1056 = vsel %vm582, %v1037, -inf
        %v1057 = vmax.f32 %v1036, %v1056
        %1058 = vmax.xlane.f32.xlu0 %v1057
        %v1059 = vpop.xlane.xlu0 %1058
        %v1060 = vsel %vm582, %v1039, -inf
        %v1061 = vmax.f32 %v1038, %v1060
        %1062 = vmax.xlane.f32.xlu0 %v1061
        %v1063 = vpop.xlane.xlu0 %1062
        %v1064 = vsel %vm582, %v1041, -inf
        %v1065 = vmax.f32 %v1040, %v1064
        %1066 = vmax.xlane.f32.xlu0 %v1065
        %v1067 = vpop.xlane.xlu0 %1066
        %v1068 = vsel %vm582, %v1043, -inf
        %v1069 = vmax.f32 %v1042, %v1068
        %1070 = vmax.xlane.f32.xlu0 %v1069
        %v1071 = vpop.xlane.xlu0 %1070
        %v1072 = vsel %vm582, %v1045, -inf
        %v1073 = vmax.f32 %v1044, %v1072
        %1074 = vmax.xlane.f32.xlu0 %v1073
        %v1075 = vpop.xlane.xlu0 %1074
        %v1076 = vsel %vm582, %v1047, -inf
        %v1077 = vmax.f32 %v1046, %v1076
        %1078 = vmax.xlane.f32.xlu0 %v1077
        %v1079 = vpop.xlane.xlu0 %1078
        %vm1080 = vcmp.eq.f32.partialorder %v1032, %v1051
        %vm1081 = vcmp.eq.f32.partialorder %v1033, %v1051
        %vm1082 = vcmp.eq.f32.partialorder %v1034, %v1055
        %vm1083 = vcmp.eq.f32.partialorder %v1035, %v1055
        %vm1084 = vcmp.eq.f32.partialorder %v1036, %v1059
        %vm1085 = vcmp.eq.f32.partialorder %v1037, %v1059
        %vm1086 = vcmp.eq.f32.partialorder %v1038, %v1063
        %vm1087 = vcmp.eq.f32.partialorder %v1039, %v1063
        %vm1088 = vcmp.eq.f32.partialorder %v1040, %v1067
        %vm1089 = vcmp.eq.f32.partialorder %v1041, %v1067
        %vm1090 = vcmp.eq.f32.partialorder %v1042, %v1071
        %vm1091 = vcmp.eq.f32.partialorder %v1043, %v1071
        %vm1092 = vcmp.eq.f32.partialorder %v1044, %v1075
        %vm1093 = vcmp.eq.f32.partialorder %v1045, %v1075
        %vm1094 = vcmp.eq.f32.partialorder %v1046, %v1079
        %vm1095 = vcmp.eq.f32.partialorder %v1047, %v1079
        %v1096 = vsel %vm1080, %v540, 200
        %v1097 = vsel %vm1081, %v541, 200
        %v1098 = vsel %vm1082, %v540, 200
        %v1099 = vsel %vm1083, %v541, 200
        %v1100 = vsel %vm1084, %v540, 200
        %v1101 = vsel %vm1085, %v541, 200
        %v1102 = vsel %vm1086, %v540, 200
        %v1103 = vsel %vm1087, %v541, 200
        %v1104 = vsel %vm1088, %v540, 200
        %v1105 = vsel %vm1089, %v541, 200
        %v1106 = vsel %vm1090, %v540, 200
        %v1107 = vsel %vm1091, %v541, 200
        %v1108 = vsel %vm1092, %v540, 200
        %v1109 = vsel %vm1093, %v541, 200
        %v1110 = vsel %vm1094, %v540, 200
        %v1111 = vsel %vm1095, %v541, 200
        %v1112 = vsel %vm582, %v1097, 2147483647
        %vm1113 = vcmp.lt.s32.totalorder %v1096, %v1112
        %v1114 = vsel %vm1113, %v1096, %v1112
        %v1115 = vand.u32 %v1114, 65535
        %v1116 = vshra.s32 %v1114, 16
        %v1117 = vcvt.s32.f32 %v1115
        %v1118 = vcvt.s32.f32 %v1116
        %1119 = vmin.xlane.f32.xlu0 %v1118
        %v1120 = vpop.xlane.xlu0 %1119
        %vm1121 = vcmp.eq.f32.partialorder %v1118, %v1120
        %v1122 = vsel %vm1121, %v1117, inf
        %1123 = vmin.xlane.f32.xlu0 %v1122
        %v1124 = vpop.xlane.xlu0 %1123
        %v1125 = vcvt.f32.s32 %v1124
        %v1126 = vcvt.f32.s32 %v1120
        %v1127 = vshll.u32 %v1126, 16
        %v1128 = vadd.s32 %v1127, %v1125
        %v1129 = vsel %vm582, %v1099, 2147483647
        %vm1130 = vcmp.lt.s32.totalorder %v1098, %v1129
        %v1131 = vsel %vm1130, %v1098, %v1129
        %v1132 = vand.u32 %v1131, 65535
        %v1133 = vshra.s32 %v1131, 16
        %v1134 = vcvt.s32.f32 %v1132
        %v1135 = vcvt.s32.f32 %v1133
        %1136 = vmin.xlane.f32.xlu0 %v1135
        %v1137 = vpop.xlane.xlu0 %1136
        %vm1138 = vcmp.eq.f32.partialorder %v1135, %v1137
        %v1139 = vsel %vm1138, %v1134, inf
        %1140 = vmin.xlane.f32.xlu0 %v1139
        %v1141 = vpop.xlane.xlu0 %1140
        %v1142 = vcvt.f32.s32 %v1141
        %v1143 = vcvt.f32.s32 %v1137
        %v1144 = vshll.u32 %v1143, 16
        %v1145 = vadd.s32 %v1144, %v1142
        %v1146 = vsel %vm582, %v1101, 2147483647
        %vm1147 = vcmp.lt.s32.totalorder %v1100, %v1146
        %v1148 = vsel %vm1147, %v1100, %v1146
        %v1149 = vand.u32 %v1148, 65535
        %v1150 = vshra.s32 %v1148, 16
        %v1151 = vcvt.s32.f32 %v1149
        %v1152 = vcvt.s32.f32 %v1150
        %1153 = vmin.xlane.f32.xlu0 %v1152
        %v1154 = vpop.xlane.xlu0 %1153
        %vm1155 = vcmp.eq.f32.partialorder %v1152, %v1154
        %v1156 = vsel %vm1155, %v1151, inf
        %1157 = vmin.xlane.f32.xlu0 %v1156
        %v1158 = vpop.xlane.xlu0 %1157
        %v1159 = vcvt.f32.s32 %v1158
        %v1160 = vcvt.f32.s32 %v1154
        %v1161 = vshll.u32 %v1160, 16
        %v1162 = vadd.s32 %v1161, %v1159
        %v1163 = vsel %vm582, %v1103, 2147483647
        %vm1164 = vcmp.lt.s32.totalorder %v1102, %v1163
        %v1165 = vsel %vm1164, %v1102, %v1163
        %v1166 = vand.u32 %v1165, 65535
        %v1167 = vshra.s32 %v1165, 16
        %v1168 = vcvt.s32.f32 %v1166
        %v1169 = vcvt.s32.f32 %v1167
        %1170 = vmin.xlane.f32.xlu0 %v1169
        %v1171 = vpop.xlane.xlu0 %1170
        %vm1172 = vcmp.eq.f32.partialorder %v1169, %v1171
        %v1173 = vsel %vm1172, %v1168, inf
        %1174 = vmin.xlane.f32.xlu0 %v1173
        %v1175 = vpop.xlane.xlu0 %1174
        %v1176 = vcvt.f32.s32 %v1175
        %v1177 = vcvt.f32.s32 %v1171
        %v1178 = vshll.u32 %v1177, 16
        %v1179 = vadd.s32 %v1178, %v1176
        %v1180 = vsel %vm582, %v1105, 2147483647
        %vm1181 = vcmp.lt.s32.totalorder %v1104, %v1180
        %v1182 = vsel %vm1181, %v1104, %v1180
        %v1183 = vand.u32 %v1182, 65535
        %v1184 = vshra.s32 %v1182, 16
        %v1185 = vcvt.s32.f32 %v1183
        %v1186 = vcvt.s32.f32 %v1184
        %1187 = vmin.xlane.f32.xlu0 %v1186
        %v1188 = vpop.xlane.xlu0 %1187
        %vm1189 = vcmp.eq.f32.partialorder %v1186, %v1188
        %v1190 = vsel %vm1189, %v1185, inf
        %1191 = vmin.xlane.f32.xlu0 %v1190
        %v1192 = vpop.xlane.xlu0 %1191
        %v1193 = vcvt.f32.s32 %v1192
        %v1194 = vcvt.f32.s32 %v1188
        %v1195 = vshll.u32 %v1194, 16
        %v1196 = vadd.s32 %v1195, %v1193
        %v1197 = vsel %vm582, %v1107, 2147483647
        %vm1198 = vcmp.lt.s32.totalorder %v1106, %v1197
        %v1199 = vsel %vm1198, %v1106, %v1197
        %v1200 = vand.u32 %v1199, 65535
        %v1201 = vshra.s32 %v1199, 16
        %v1202 = vcvt.s32.f32 %v1200
        %v1203 = vcvt.s32.f32 %v1201
        %1204 = vmin.xlane.f32.xlu0 %v1203
        %v1205 = vpop.xlane.xlu0 %1204
        %vm1206 = vcmp.eq.f32.partialorder %v1203, %v1205
        %v1207 = vsel %vm1206, %v1202, inf
        %1208 = vmin.xlane.f32.xlu0 %v1207
        %v1209 = vpop.xlane.xlu0 %1208
        %v1210 = vcvt.f32.s32 %v1209
        %v1211 = vcvt.f32.s32 %v1205
        %v1212 = vshll.u32 %v1211, 16
        %v1213 = vadd.s32 %v1212, %v1210
        %v1214 = vsel %vm582, %v1109, 2147483647
        %vm1215 = vcmp.lt.s32.totalorder %v1108, %v1214
        %v1216 = vsel %vm1215, %v1108, %v1214
        %v1217 = vand.u32 %v1216, 65535
        %v1218 = vshra.s32 %v1216, 16
        %v1219 = vcvt.s32.f32 %v1217
        %v1220 = vcvt.s32.f32 %v1218
        %1221 = vmin.xlane.f32.xlu0 %v1220
        %v1222 = vpop.xlane.xlu0 %1221
        %vm1223 = vcmp.eq.f32.partialorder %v1220, %v1222
        %v1224 = vsel %vm1223, %v1219, inf
        %1225 = vmin.xlane.f32.xlu0 %v1224
        %v1226 = vpop.xlane.xlu0 %1225
        %v1227 = vcvt.f32.s32 %v1226
        %v1228 = vcvt.f32.s32 %v1222
        %v1229 = vshll.u32 %v1228, 16
        %v1230 = vadd.s32 %v1229, %v1227
        %v1231 = vsel %vm582, %v1111, 2147483647
        %vm1232 = vcmp.lt.s32.totalorder %v1110, %v1231
        %v1233 = vsel %vm1232, %v1110, %v1231
        %v1234 = vand.u32 %v1233, 65535
        %v1235 = vshra.s32 %v1233, 16
        %v1236 = vcvt.s32.f32 %v1234
        %v1237 = vcvt.s32.f32 %v1235
        %1238 = vmin.xlane.f32.xlu0 %v1237
        %v1239 = vpop.xlane.xlu0 %1238
        %vm1240 = vcmp.eq.f32.partialorder %v1237, %v1239
        %v1241 = vsel %vm1240, %v1236, inf
        %1242 = vmin.xlane.f32.xlu0 %v1241
        %v1243 = vpop.xlane.xlu0 %1242
        %v1244 = vcvt.f32.s32 %v1243
        %v1245 = vcvt.f32.s32 %v1239
        %v1246 = vshll.u32 %v1245, 16
        %v1247 = vadd.s32 %v1246, %v1244
        %vm1248 = vcmp.eq.s32.totalorder %v1128, %v515
        %vm1249 = vcmp.eq.s32.totalorder %v1145, %v516
        %vm1250 = vcmp.eq.s32.totalorder %v1162, %v517
        %vm1251 = vcmp.eq.s32.totalorder %v1179, %v518
        %vm1252 = vcmp.eq.s32.totalorder %v1196, %v519
        %vm1253 = vcmp.eq.s32.totalorder %v1213, %v520
        %vm1254 = vcmp.eq.s32.totalorder %v1230, %v521
        %vm1255 = vcmp.eq.s32.totalorder %v1247, %v522
        %v1256 = vsel %vm1248, 1, 0
        %v1257 = vsel %vm1249, 1, 0
        %v1258 = vsel %vm1250, 1, 0
        %v1259 = vsel %vm1251, 1, 0
        %v1260 = vsel %vm1252, 1, 0
        %v1261 = vsel %vm1253, 1, 0
        %v1262 = vsel %vm1254, 1, 0
        %v1263 = vsel %vm1255, 1, 0
        %v1264 = vcvt.s32.f32 %v1256
        %v1265 = vcvt.s32.f32 %v1257
        %v1266 = vcvt.s32.f32 %v1258
        %v1267 = vcvt.s32.f32 %v1259
        %v1268 = vcvt.s32.f32 %v1260
        %v1269 = vcvt.s32.f32 %v1261
        %v1270 = vcvt.s32.f32 %v1262
        %v1271 = vcvt.s32.f32 %v1263
        %v1272 = vmul.f32 %v1264, %v507
        %v1273 = vmul.f32 %v1265, %v508
        %v1274 = vmul.f32 %v1266, %v509
        %v1275 = vmul.f32 %v1267, %v510
        %v1276 = vmul.f32 %v1268, %v511
        %v1277 = vmul.f32 %v1269, %v512
        %v1278 = vmul.f32 %v1270, %v513
        %v1279 = vmul.f32 %v1271, %v514
        %v1280 = vsel %vm783, %v1272, 0.0
        %v1281 = vsel %vm783, %v1273, 0.0
        %v1282 = vadd.f32 %v1280, %v1281
        %v1283 = vsel %vm783, %v1274, 0.0
        %v1284 = vadd.f32 %v1282, %v1283
        %v1285 = vsel %vm783, %v1275, 0.0
        %v1286 = vadd.f32 %v1284, %v1285
        %v1287 = vsel %vm783, %v1276, 0.0
        %v1288 = vadd.f32 %v1286, %v1287
        %v1289 = vsel %vm783, %v1277, 0.0
        %v1290 = vadd.f32 %v1288, %v1289
        %v1291 = vsel %vm783, %v1278, 0.0
        %v1292 = vadd.f32 %v1290, %v1291
        %v1293 = vsel %vm783, %v1279, 0.0
        %v1294 = vadd.f32 %v1292, %v1293
        %1295 = vadd.xlane.f32.xlu0 %v1294
        %v1296 = vpop.xlane.xlu0 %1295
        %v1297 = vrot.slane %v1296, 4
        %v1298 = vadd.f32 %v1296, %v1297
        %v1299 = vrot.slane %v1298, 2
        %v1300 = vadd.f32 %v1298, %v1299
        %v1301 = vrot.slane %v1300, 1
        %v1302 = vadd.f32 %v1300, %v1301
        %s1303 = vtos %v1302
        %v1304 = vld [vmem:[%s365] sm:$0xff]
        %v1305 = vld [vmem:[%s365 + $0x8] sm:$0xff]
        %v1306 = vld [vmem:[%s365 + $0x10] sm:$0xff]
        %v1307 = vld [vmem:[%s365 + $0x18] sm:$0xff]
        %v1308 = vld [vmem:[%s365 + $0x20] sm:$0xff]
        %v1309 = vld [vmem:[%s365 + $0x28] sm:$0xff]
        %v1310 = vld [vmem:[%s365 + $0x30] sm:$0xff]
        %v1311 = vld [vmem:[%s365 + $0x38] sm:$0xff]
        %v1312 = vld [vmem:[%s365 + $0x40] sm:$0xff]
        %v1313 = vld [vmem:[%s365 + $0x48] sm:$0xff]
        %v1314 = vld [vmem:[%s365 + $0x50] sm:$0xff]
        %v1315 = vld [vmem:[%s365 + $0x58] sm:$0xff]
        %v1316 = vld [vmem:[%s365 + $0x60] sm:$0xff]
        %v1317 = vld [vmem:[%s365 + $0x68] sm:$0xff]
        %v1318 = vld [vmem:[%s365 + $0x70] sm:$0xff]
        %v1319 = vld [vmem:[%s365 + $0x78] sm:$0xff]
        %v1320 = vsel %vm582, %v1305, -inf
        %v1321 = vmax.f32 %v1304, %v1320
        %1322 = vmax.xlane.f32.xlu0 %v1321
        %v1323 = vpop.xlane.xlu0 %1322
        %v1324 = vsel %vm582, %v1307, -inf
        %v1325 = vmax.f32 %v1306, %v1324
        %1326 = vmax.xlane.f32.xlu0 %v1325
        %v1327 = vpop.xlane.xlu0 %1326
        %v1328 = vsel %vm582, %v1309, -inf
        %v1329 = vmax.f32 %v1308, %v1328
        %1330 = vmax.xlane.f32.xlu0 %v1329
        %v1331 = vpop.xlane.xlu0 %1330
        %v1332 = vsel %vm582, %v1311, -inf
        %v1333 = vmax.f32 %v1310, %v1332
        %1334 = vmax.xlane.f32.xlu0 %v1333
        %v1335 = vpop.xlane.xlu0 %1334
        %v1336 = vsel %vm582, %v1313, -inf
        %v1337 = vmax.f32 %v1312, %v1336
        %1338 = vmax.xlane.f32.xlu0 %v1337
        %v1339 = vpop.xlane.xlu0 %1338
        %v1340 = vsel %vm582, %v1315, -inf
        %v1341 = vmax.f32 %v1314, %v1340
        %1342 = vmax.xlane.f32.xlu0 %v1341
        %v1343 = vpop.xlane.xlu0 %1342
        %v1344 = vsel %vm582, %v1317, -inf
        %v1345 = vmax.f32 %v1316, %v1344
        %1346 = vmax.xlane.f32.xlu0 %v1345
        %v1347 = vpop.xlane.xlu0 %1346
        %v1348 = vsel %vm582, %v1319, -inf
        %v1349 = vmax.f32 %v1318, %v1348
        %1350 = vmax.xlane.f32.xlu0 %v1349
        %v1351 = vpop.xlane.xlu0 %1350
        %vm1352 = vcmp.eq.f32.partialorder %v1304, %v1323
        %vm1353 = vcmp.eq.f32.partialorder %v1305, %v1323
        %vm1354 = vcmp.eq.f32.partialorder %v1306, %v1327
        %vm1355 = vcmp.eq.f32.partialorder %v1307, %v1327
        %vm1356 = vcmp.eq.f32.partialorder %v1308, %v1331
        %vm1357 = vcmp.eq.f32.partialorder %v1309, %v1331
        %vm1358 = vcmp.eq.f32.partialorder %v1310, %v1335
        %vm1359 = vcmp.eq.f32.partialorder %v1311, %v1335
        %vm1360 = vcmp.eq.f32.partialorder %v1312, %v1339
        %vm1361 = vcmp.eq.f32.partialorder %v1313, %v1339
        %vm1362 = vcmp.eq.f32.partialorder %v1314, %v1343
        %vm1363 = vcmp.eq.f32.partialorder %v1315, %v1343
        %vm1364 = vcmp.eq.f32.partialorder %v1316, %v1347
        %vm1365 = vcmp.eq.f32.partialorder %v1317, %v1347
        %vm1366 = vcmp.eq.f32.partialorder %v1318, %v1351
        %vm1367 = vcmp.eq.f32.partialorder %v1319, %v1351
        %v1368 = vsel %vm1352, %v540, 200
        %v1369 = vsel %vm1353, %v541, 200
        %v1370 = vsel %vm1354, %v540, 200
        %v1371 = vsel %vm1355, %v541, 200
        %v1372 = vsel %vm1356, %v540, 200
        %v1373 = vsel %vm1357, %v541, 200
        %v1374 = vsel %vm1358, %v540, 200
        %v1375 = vsel %vm1359, %v541, 200
        %v1376 = vsel %vm1360, %v540, 200
        %v1377 = vsel %vm1361, %v541, 200
        %v1378 = vsel %vm1362, %v540, 200
        %v1379 = vsel %vm1363, %v541, 200
        %v1380 = vsel %vm1364, %v540, 200
        %v1381 = vsel %vm1365, %v541, 200
        %v1382 = vsel %vm1366, %v540, 200
        %v1383 = vsel %vm1367, %v541, 200
        %v1384 = vsel %vm582, %v1369, 2147483647
        %vm1385 = vcmp.lt.s32.totalorder %v1368, %v1384
        %v1386 = vsel %vm1385, %v1368, %v1384
        %v1387 = vand.u32 %v1386, 65535
        %v1388 = vshra.s32 %v1386, 16
        %v1389 = vcvt.s32.f32 %v1387
        %v1390 = vcvt.s32.f32 %v1388
        %1391 = vmin.xlane.f32.xlu0 %v1390
        %v1392 = vpop.xlane.xlu0 %1391
        %vm1393 = vcmp.eq.f32.partialorder %v1390, %v1392
        %v1394 = vsel %vm1393, %v1389, inf
        %1395 = vmin.xlane.f32.xlu0 %v1394
        %v1396 = vpop.xlane.xlu0 %1395
        %v1397 = vcvt.f32.s32 %v1396
        %v1398 = vcvt.f32.s32 %v1392
        %v1399 = vshll.u32 %v1398, 16
        %v1400 = vadd.s32 %v1399, %v1397
        %v1401 = vsel %vm582, %v1371, 2147483647
        %vm1402 = vcmp.lt.s32.totalorder %v1370, %v1401
        %v1403 = vsel %vm1402, %v1370, %v1401
        %v1404 = vand.u32 %v1403, 65535
        %v1405 = vshra.s32 %v1403, 16
        %v1406 = vcvt.s32.f32 %v1404
        %v1407 = vcvt.s32.f32 %v1405
        %1408 = vmin.xlane.f32.xlu0 %v1407
        %v1409 = vpop.xlane.xlu0 %1408
        %vm1410 = vcmp.eq.f32.partialorder %v1407, %v1409
        %v1411 = vsel %vm1410, %v1406, inf
        %1412 = vmin.xlane.f32.xlu0 %v1411
        %v1413 = vpop.xlane.xlu0 %1412
        %v1414 = vcvt.f32.s32 %v1413
        %v1415 = vcvt.f32.s32 %v1409
        %v1416 = vshll.u32 %v1415, 16
        %v1417 = vadd.s32 %v1416, %v1414
        %v1418 = vsel %vm582, %v1373, 2147483647
        %vm1419 = vcmp.lt.s32.totalorder %v1372, %v1418
        %v1420 = vsel %vm1419, %v1372, %v1418
        %v1421 = vand.u32 %v1420, 65535
        %v1422 = vshra.s32 %v1420, 16
        %v1423 = vcvt.s32.f32 %v1421
        %v1424 = vcvt.s32.f32 %v1422
        %1425 = vmin.xlane.f32.xlu0 %v1424
        %v1426 = vpop.xlane.xlu0 %1425
        %vm1427 = vcmp.eq.f32.partialorder %v1424, %v1426
        %v1428 = vsel %vm1427, %v1423, inf
        %1429 = vmin.xlane.f32.xlu0 %v1428
        %v1430 = vpop.xlane.xlu0 %1429
        %v1431 = vcvt.f32.s32 %v1430
        %v1432 = vcvt.f32.s32 %v1426
        %v1433 = vshll.u32 %v1432, 16
        %v1434 = vadd.s32 %v1433, %v1431
        %v1435 = vsel %vm582, %v1375, 2147483647
        %vm1436 = vcmp.lt.s32.totalorder %v1374, %v1435
        %v1437 = vsel %vm1436, %v1374, %v1435
        %v1438 = vand.u32 %v1437, 65535
        %v1439 = vshra.s32 %v1437, 16
        %v1440 = vcvt.s32.f32 %v1438
        %v1441 = vcvt.s32.f32 %v1439
        %1442 = vmin.xlane.f32.xlu0 %v1441
        %v1443 = vpop.xlane.xlu0 %1442
        %vm1444 = vcmp.eq.f32.partialorder %v1441, %v1443
        %v1445 = vsel %vm1444, %v1440, inf
        %1446 = vmin.xlane.f32.xlu0 %v1445
        %v1447 = vpop.xlane.xlu0 %1446
        %v1448 = vcvt.f32.s32 %v1447
        %v1449 = vcvt.f32.s32 %v1443
        %v1450 = vshll.u32 %v1449, 16
        %v1451 = vadd.s32 %v1450, %v1448
        %v1452 = vsel %vm582, %v1377, 2147483647
        %vm1453 = vcmp.lt.s32.totalorder %v1376, %v1452
        %v1454 = vsel %vm1453, %v1376, %v1452
        %v1455 = vand.u32 %v1454, 65535
        %v1456 = vshra.s32 %v1454, 16
        %v1457 = vcvt.s32.f32 %v1455
        %v1458 = vcvt.s32.f32 %v1456
        %1459 = vmin.xlane.f32.xlu0 %v1458
        %v1460 = vpop.xlane.xlu0 %1459
        %vm1461 = vcmp.eq.f32.partialorder %v1458, %v1460
        %v1462 = vsel %vm1461, %v1457, inf
        %1463 = vmin.xlane.f32.xlu0 %v1462
        %v1464 = vpop.xlane.xlu0 %1463
        %v1465 = vcvt.f32.s32 %v1464
        %v1466 = vcvt.f32.s32 %v1460
        %v1467 = vshll.u32 %v1466, 16
        %v1468 = vadd.s32 %v1467, %v1465
        %v1469 = vsel %vm582, %v1379, 2147483647
        %vm1470 = vcmp.lt.s32.totalorder %v1378, %v1469
        %v1471 = vsel %vm1470, %v1378, %v1469
        %v1472 = vand.u32 %v1471, 65535
        %v1473 = vshra.s32 %v1471, 16
        %v1474 = vcvt.s32.f32 %v1472
        %v1475 = vcvt.s32.f32 %v1473
        %1476 = vmin.xlane.f32.xlu0 %v1475
        %v1477 = vpop.xlane.xlu0 %1476
        %vm1478 = vcmp.eq.f32.partialorder %v1475, %v1477
        %v1479 = vsel %vm1478, %v1474, inf
        %1480 = vmin.xlane.f32.xlu0 %v1479
        %v1481 = vpop.xlane.xlu0 %1480
        %v1482 = vcvt.f32.s32 %v1481
        %v1483 = vcvt.f32.s32 %v1477
        %v1484 = vshll.u32 %v1483, 16
        %v1485 = vadd.s32 %v1484, %v1482
        %v1486 = vsel %vm582, %v1381, 2147483647
        %vm1487 = vcmp.lt.s32.totalorder %v1380, %v1486
        %v1488 = vsel %vm1487, %v1380, %v1486
        %v1489 = vand.u32 %v1488, 65535
        %v1490 = vshra.s32 %v1488, 16
        %v1491 = vcvt.s32.f32 %v1489
        %v1492 = vcvt.s32.f32 %v1490
        %1493 = vmin.xlane.f32.xlu0 %v1492
        %v1494 = vpop.xlane.xlu0 %1493
        %vm1495 = vcmp.eq.f32.partialorder %v1492, %v1494
        %v1496 = vsel %vm1495, %v1491, inf
        %1497 = vmin.xlane.f32.xlu0 %v1496
        %v1498 = vpop.xlane.xlu0 %1497
        %v1499 = vcvt.f32.s32 %v1498
        %v1500 = vcvt.f32.s32 %v1494
        %v1501 = vshll.u32 %v1500, 16
        %v1502 = vadd.s32 %v1501, %v1499
        %v1503 = vsel %vm582, %v1383, 2147483647
        %vm1504 = vcmp.lt.s32.totalorder %v1382, %v1503
        %v1505 = vsel %vm1504, %v1382, %v1503
        %v1506 = vand.u32 %v1505, 65535
        %v1507 = vshra.s32 %v1505, 16
        %v1508 = vcvt.s32.f32 %v1506
        %v1509 = vcvt.s32.f32 %v1507
        %1510 = vmin.xlane.f32.xlu0 %v1509
        %v1511 = vpop.xlane.xlu0 %1510
        %vm1512 = vcmp.eq.f32.partialorder %v1509, %v1511
        %v1513 = vsel %vm1512, %v1508, inf
        %1514 = vmin.xlane.f32.xlu0 %v1513
        %v1515 = vpop.xlane.xlu0 %1514
        %v1516 = vcvt.f32.s32 %v1515
        %v1517 = vcvt.f32.s32 %v1511
        %v1518 = vshll.u32 %v1517, 16
        %v1519 = vadd.s32 %v1518, %v1516
        %vm1520 = vcmp.eq.s32.totalorder %v1400, %v515
        %vm1521 = vcmp.eq.s32.totalorder %v1417, %v516
        %vm1522 = vcmp.eq.s32.totalorder %v1434, %v517
        %vm1523 = vcmp.eq.s32.totalorder %v1451, %v518
        %vm1524 = vcmp.eq.s32.totalorder %v1468, %v519
        %vm1525 = vcmp.eq.s32.totalorder %v1485, %v520
        %vm1526 = vcmp.eq.s32.totalorder %v1502, %v521
        %vm1527 = vcmp.eq.s32.totalorder %v1519, %v522
        %v1528 = vsel %vm1520, 1, 0
        %v1529 = vsel %vm1521, 1, 0
        %v1530 = vsel %vm1522, 1, 0
        %v1531 = vsel %vm1523, 1, 0
        %v1532 = vsel %vm1524, 1, 0
        %v1533 = vsel %vm1525, 1, 0
        %v1534 = vsel %vm1526, 1, 0
        %v1535 = vsel %vm1527, 1, 0
        %v1536 = vcvt.s32.f32 %v1528
        %v1537 = vcvt.s32.f32 %v1529
        %v1538 = vcvt.s32.f32 %v1530
        %v1539 = vcvt.s32.f32 %v1531
        %v1540 = vcvt.s32.f32 %v1532
        %v1541 = vcvt.s32.f32 %v1533
        %v1542 = vcvt.s32.f32 %v1534
        %v1543 = vcvt.s32.f32 %v1535
        %v1544 = vmul.f32 %v1536, %v507
        %v1545 = vmul.f32 %v1537, %v508
        %v1546 = vmul.f32 %v1538, %v509
        %v1547 = vmul.f32 %v1539, %v510
        %v1548 = vmul.f32 %v1540, %v511
        %v1549 = vmul.f32 %v1541, %v512
        %v1550 = vmul.f32 %v1542, %v513
        %v1551 = vmul.f32 %v1543, %v514
        %v1552 = vsel %vm783, %v1544, 0.0
        %v1553 = vsel %vm783, %v1545, 0.0
        %v1554 = vadd.f32 %v1552, %v1553
        %v1555 = vsel %vm783, %v1546, 0.0
        %v1556 = vadd.f32 %v1554, %v1555
        %v1557 = vsel %vm783, %v1547, 0.0
        %v1558 = vadd.f32 %v1556, %v1557
        %v1559 = vsel %vm783, %v1548, 0.0
        %v1560 = vadd.f32 %v1558, %v1559
        %v1561 = vsel %vm783, %v1549, 0.0
        %v1562 = vadd.f32 %v1560, %v1561
        %v1563 = vsel %vm783, %v1550, 0.0
        %v1564 = vadd.f32 %v1562, %v1563
        %v1565 = vsel %vm783, %v1551, 0.0
        %v1566 = vadd.f32 %v1564, %v1565
        %1567 = vadd.xlane.f32.xlu0 %v1566
        %v1568 = vpop.xlane.xlu0 %1567
        %v1569 = vrot.slane %v1568, 4
        %v1570 = vadd.f32 %v1568, %v1569
        %v1571 = vrot.slane %v1570, 2
        %v1572 = vadd.f32 %v1570, %v1571
        %v1573 = vrot.slane %v1572, 1
        %v1574 = vadd.f32 %v1572, %v1573
        %s1575 = vtos %v1574
        %v1576 = vld [vmem:[%s412] sm:$0xff]
        %vm1577 = vcmp.eq.s32.totalorder %v540, 0
        %v1578 = vstv %s807
        %v1579 = vsel %vm1577, %v1578, 0.0
        %vm1580 = vcmp.eq.s32.totalorder %v540, 1
        %v1581 = vstv %s1031
        %v1582 = vsel %vm1580, %v1581, 0.0
        %v1583 = vadd.f32 %v1579, %v1582
        %vm1584 = vcmp.eq.s32.totalorder %v540, 2
        %v1585 = vstv %s1303
        %v1586 = vsel %vm1584, %v1585, 0.0
        %v1587 = vadd.f32 %v1583, %v1586
        %vm1588 = vcmp.eq.s32.totalorder %v540, 3
        %v1589 = vstv %s1575
        %v1590 = vsel %vm1588, %v1589, 0.0
        %v1591 = vadd.f32 %v1587, %v1590
        %v1592 = vadd.f32 %v1576, %v1591
        %1593 = vst [vmem:[%s412] sm:$0xff] %v1592
        %s1594 = sand.u32 %s180, 1
        %s1595 = scalar_lea.sflag [#allocation4], %s1594
        %s1596 = sand.u32 %s180, 1
        %s1597 = smul.addr %s1596, 8
        %s1598 = scalar_lea.vmem [#allocation8], %s1597
        // Predicated region
        $region53: #{tpu_custom_call.1} parent=35 // pred_check
          %p1599 = pneg %p190
        $region54: #{tpu_custom_call.1} parent=35 // pred_check_branch
          %1601 = sbr.rel (%p1599) target = $region56
        $region55: #{tpu_custom_call.1} parent=35 // pred_region
          %s1603 = ssub.s32 128, 128
          %1604 = vsyncadd %s1595, %s1603
          %s1605 = smul.addr %s28, 128
          %s1606 = scalar_lea.hbm %s4, %s1605
          %s1608 = sshll.u32 %s1598, 4
          %s1609 = int_to_ptr.vmem [resolvable:$true] %s1608
          %1611 = dma.vmem_to_hbm [thread:$0]  %s1609, 128, %s1606, %s1595
        $region56: #{tpu_custom_call.1} parent=35 // pred_fallthru
          _
      $region36: #{tpu_custom_call.1} parent=5 // pred_fallthru
        _
      %p1612 = scmp.le.s32.totalorder 2, %s19
      // Predicated region
      $region57: #{tpu_custom_call.1} parent=5 // pred_check
        %p1613 = pneg %p1612
      $region58: #{tpu_custom_call.1} parent=5 // pred_check_branch
        %1615 = sbr.rel (%p1613) target = $region60
      $region59: #{tpu_custom_call.1} parent=5 // pred_region
        %s1616 = ssub.s32 %s19, 2
        // Predicated region
        $region61: #{tpu_custom_call.1} parent=59 // pred_check
          %p1617 = pneg %p196
        $region62: #{tpu_custom_call.1} parent=59 // pred_check_branch
          %1619 = sbr.rel (%p1617) target = $region64
        $region63: #{tpu_custom_call.1} parent=59 // pred_region
          %s1620 = sand.u32 %s181, 1
          %s1621 = scalar_lea.sflag [#allocation4], %s1620
          %s1622 = sand.u32 %s181, 1
          %s1623 = smul.addr %s1622, 8
          %s1624 = scalar_lea.vmem [#allocation8], %s1623
          %1625 = dma.done %s1621, 128
        $region64: #{tpu_custom_call.1} parent=59 // pred_fallthru
          _
      $region60: #{tpu_custom_call.1} parent=5 // pred_fallthru
        _
    $region6: #{tpu_custom_call.1} parent=1 // loop_footer
      %s23 = sadd.s32 1, %s19
    $region7: #{tpu_custom_call.1} parent=1 // loop_footer_branch
      %18 = sbr.rel target = $region3
    $region8: #{tpu_custom_call.1} parent=1 // loop_exit
      _
    %1626 = vsyncpa [#allocation3], 1
    %s1627 = scalar_lea.sflag [#allocation3], 1
    %1628 = vsyncpa %s1627, 1
    %1629 = vsyncpa [#allocation6], 1
    %s1630 = scalar_lea.sflag [#allocation6], 1
    %1631 = vsyncpa %s1630, 1
    %1632 = vsyncpa [#allocation4], 1
    %s1633 = scalar_lea.sflag [#allocation4], 1
    %1634 = vsyncpa %s1633, 1

</llo_original>
